<compile_context>
chip_gen: v5e
topology: v5e:2x2
jax: 0.10.0
libtpu: 0.0.40
codegen_flags: <defaults>
</compile_context>

<pallas_src>
import functools

import numpy as np
import jax
import jax.numpy as jnp
from jax import lax
from jax.experimental import pallas as pl
from jax.experimental.pallas import tpu as pltpu

EPS = 1e-5


def _batchnorm(y, relu):
    """BatchNorm2d (training, affine=False) on (N, C, S): per-channel biased stats."""
    n, _, s = y.shape
    inv_cnt = 1.0 / (n * s)
    s1 = jnp.sum(y, axis=(0, 2), keepdims=True)            # (1, C, 1)
    s2 = jnp.sum(y * y, axis=(0, 2), keepdims=True)        # fused single pass
    mean = s1 * inv_cnt
    var = jnp.maximum(s2 * inv_cnt - mean * mean, 0.0)      # clamp: no negative var
    y = (y - mean) * lax.rsqrt(var + EPS)
    if relu:
        y = jnp.maximum(y, 0.0)
    return y


def _pointwise(x, w_ref):
    """1x1 conv: x (N, Cin, S) with w_ref (Cin, 1, Cout, S) -> (N, Cout, S).

    Unrolled VPU broadcast-FMA over the tiny contraction dim.  Weights are already
    lane-broadcast (done once in the wrapper), so each term is a static ref-index
    load + one multiply-add; acc is initialized with the first term.
    """
    # TODO(synk): at realistic NAS-Bench widths (C >= 32) switch this to an MXU matmul
    #             ((N*S, Cin) @ (Cin, Cout), preferred_element_type=f32) instead of
    #             Cin full-tensor VPU passes.
    cin = x.shape[1]
    acc = x[:, 0:1, :] * w_ref[0]                           # (N,1,S) * (1,Cout,S)
    for ci in range(1, cin):                                # static unroll (cin <= 12)
        acc = acc + x[:, ci:ci + 1, :] * w_ref[ci]
    return acc


def _depthwise(h, wdw_ref, colm_ref, rowm_ref, W, k):
    """Depthwise k x k conv, stride 1, zero pad k//2, on (N, C, H*W) layout.

    Separable-shift form: (k-1) lane rolls for column offsets, per-row weighted
    partial sums, then (k-1) row rolls (+/- W) on the partials.  Zero padding is
    realised with precomputed constant border masks (inputs), not runtime selects.
    """
    s = h.shape[2]
    p = k // 2

    # Column taps: one roll + one constant-mask multiply per nonzero column offset.
    cols = []
    for d in range(k):                                      # static unroll (k small)
        off = d - p
        if off == 0:
            cols.append(h)
        else:
            cols.append(pltpu.roll(h, shift=(-off) % s, axis=2) * colm_ref[d])

    # Row partials: weighted sum over column taps, then a single row roll + row mask.
    acc = None
    for e in range(k):
        oh = e - p
        r = cols[0] * wdw_ref[e * k + 0]                    # init with first term
        for d in range(1, k):
            r = r + cols[d] * wdw_ref[e * k + d]
        if oh != 0:
            r = pltpu.roll(r, shift=(-oh * W) % s, axis=2) * rowm_ref[e]
        acc = r if acc is None else acc + r
    return acc


def _inverted_residual_kernel(x_ref, w1_ref, wdw_ref, w2_ref, colm_ref, rowm_ref,
                              o_ref, *, W, k, use_shortcut):
    # x_ref: (N, Cin, H*W) — spatial on the lane axis (lane-dense loads/stores).
    # TODO(synk): bf16 activation math (keeping BN stats in f32) is a ~2x VPU/VMEM win
    #             on v6e/v7x but must stay f32 on v5e (no bf16 VALU); needs a per-chip
    #             dtype switch via pltpu.get_tpu_info().
    x = x_ref[...].astype(jnp.float32)

    h = _batchnorm(_pointwise(x, w1_ref), relu=True)              # expand -> BN -> ReLU
    h = _batchnorm(_depthwise(h, wdw_ref, colm_ref, rowm_ref, W, k),
                   relu=True)                                      # dw conv -> BN -> ReLU
    out = _batchnorm(_pointwise(h, w2_ref), relu=False)            # project -> BN
    if use_shortcut:
        out = out + x
    o_ref[...] = out.astype(o_ref.dtype)                           # dense 256-lane store


def _border_masks(H, W, k):
    """Trace-time (numpy) zero-padding masks for the flattened-spatial depthwise conv."""
    p = k // 2
    S = H * W
    jw = np.arange(S) % W
    ih = np.arange(S) // W
    col = np.stack([((jw + (d - p) >= 0) & (jw + (d - p) < W)).astype(np.float32)
                    for d in range(k)])
    row = np.stack([((ih + (e - p) >= 0) & (ih + (e - p) < H)).astype(np.float32)
                    for e in range(k)])
    return (jnp.asarray(col.reshape(k, 1, 1, S)),
            jnp.asarray(row.reshape(k, 1, 1, S)))


def inverted_residual(x_nchw, w1, wdw, w2, *, stride, k, use_shortcut):
    """Pallas-backed forward of the t != 1 InvertedResidual branch.

    x_nchw: (N, Cin, H, W) f32
    w1:  (Cin, Chid)   == Conv2d(inp, hidden, 1).weight transposed
    wdw: (k, k, Chid)  == depthwise Conv2d(hidden, hidden, k, groups=hidden).weight
    w2:  (Chid, Cout)  == Conv2d(hidden, oup, 1).weight transposed
    """
    # TODO(synk): stride=2 depthwise path (strided output subsampling) and the t == 1
    #             branch (no expansion conv) of the PyTorch module are not wired up.
    assert stride == 1, "kernel currently implements the stride=1 path"
    N, Cin, H, W = x_nchw.shape
    Chid = w1.shape[1]
    Cout = w2.shape[1]
    S = H * W

    x = x_nchw.reshape(N, Cin, S)                           # free reshape, no transpose

    # Hoisted weight lane-broadcasts: weights arrive lane-dense so the kernel loops do
    # no broadcast_in_dim.  Leading dim is the contraction/tap index; the extra size-1
    # dim makes w_ref[i] directly broadcast-compatible with (N, 1, S) activations.
    w1b = jnp.broadcast_to(w1.reshape(Cin, 1, Chid, 1), (Cin, 1, Chid, S))
    wdwb = jnp.broadcast_to(wdw.reshape(k * k, 1, Chid, 1), (k * k, 1, Chid, S))
    w2b = jnp.broadcast_to(w2.reshape(Chid, 1, Cout, 1), (Chid, 1, Cout, S))
    col_m, row_m = _border_masks(H, W, k)                   # numpy -> constant inputs

    kernel = functools.partial(_inverted_residual_kernel, W=W, k=k,
                               use_shortcut=use_shortcut)
    # TODO(synk): at realistic NAS-Bench widths, add an N/H-tiled grid with
    #             dimension_semantics=("parallel", ..., "arbitrary"), cross-tile BN-stat
    #             accumulation in VMEM scratch, and an explicit vmem_limit_bytes —
    #             mandatory on v7x (64 MiB VMEM, 2 TCs) and for v5e's 16 MiB scoped default.
    # TODO(synk): if these toy widths are the real workload, fold N into the sublane axis
    #             ((N*C, S) slabs) to stop wasting 50%/25% of each 8-sublane f32 vreg.
    out = pl.pallas_call(
        kernel,
        out_shape=jax.ShapeDtypeStruct((N, Cout, S), x.dtype),
        in_specs=[pl.BlockSpec(memory_space=pltpu.MemorySpace.VMEM)] * 6,
        out_specs=pl.BlockSpec(memory_space=pltpu.MemorySpace.VMEM),
    )(x, w1b, wdwb, w2b, col_m, row_m)
    return out.reshape(N, Cout, H, W)                       # free reshape, no transpose


def ref_inverted_residual(x, w1, wdw, w2, *, stride, use_shortcut):
    """Independent pure-JAX NCHW reference mirroring the PyTorch module (training-mode BN)."""
    Cin, Chid = w1.shape
    Cout = w2.shape[1]
    k = wdw.shape[0]

    def bn(y, relu):
        mean = jnp.mean(y, axis=(0, 2, 3), keepdims=True)
        var = jnp.mean((y - mean) ** 2, axis=(0, 2, 3), keepdims=True)
        y = (y - mean) / jnp.sqrt(var + EPS)
        return jnp.maximum(y, 0.0) if relu else y

    w1_oihw = w1.T.reshape(Chid, Cin, 1, 1)
    h = lax.conv_general_dilated(x, w1_oihw, (1, 1), "VALID")
    h = bn(h, True)
    wdw_oihw = jnp.transpose(wdw, (2, 0, 1)).reshape(Chid, 1, k, k)
    h = lax.conv_general_dilated(h, wdw_oihw, (stride, stride),
                                 [(k // 2, k // 2), (k // 2, k // 2)],
                                 feature_group_count=Chid)
    h = bn(h, True)
    w2_oihw = w2.T.reshape(Cout, Chid, 1, 1)
    out = lax.conv_general_dilated(h, w2_oihw, (1, 1), "VALID")
    out = bn(out, False)
    if use_shortcut:
        out = out + x
    return out


if __name__ == "__main__":
    # Module hyper-parameters (t != 1 branch): inp=4, oup=4, stride=1, t=3, k=3
    inp, oup, stride, t, k = 4, 4, 1, 3, 3
    hidden = round(inp * t)                                 # 12
    use_shortcut = (inp == oup) and (stride == 1)

    key = jax.random.PRNGKey(0)
    kx, k1, kd, k2 = jax.random.split(key, 4)
    N, H, W = 2, 16, 16
    x = jax.random.normal(kx, (N, inp, H, W), dtype=jnp.float32)

    # Deterministic synthetic conv weights (no bias):
    w1 = 0.3 * jax.random.normal(k1, (inp, hidden), dtype=jnp.float32)
    wdw = 0.3 * jax.random.normal(kd, (k, k, hidden), dtype=jnp.float32)
    w2 = 0.3 * jax.random.normal(k2, (hidden, oup), dtype=jnp.float32)

    out = inverted_residual(x, w1, wdw, w2, stride=stride, k=k,
                            use_shortcut=use_shortcut)
    out = jax.block_until_ready(out)

    ref = ref_inverted_residual(x, w1, wdw, w2, stride=stride,
                                use_shortcut=use_shortcut)
    ref = jax.block_until_ready(ref)

    assert out.shape == (N, oup, H, W), out.shape
    max_err = float(jnp.max(jnp.abs(out - ref)))
    assert max_err < 1e-3, f"mismatch vs reference: max abs err {max_err}"
    print("KERNEL_OK")
</pallas_src>

<mosaic_0001>
module attributes {stable_mosaic.version = 11 : i64} {
  func.func @_inverted_residual_kernel(%arg0: memref<2x4x256xf32, #tpu.memory_space<vmem>>, %arg1: memref<4x1x12x256xf32, #tpu.memory_space<vmem>>, %arg2: memref<9x1x12x256xf32, #tpu.memory_space<vmem>>, %arg3: memref<12x1x4x256xf32, #tpu.memory_space<vmem>>, %arg4: memref<3x1x1x256xf32, #tpu.memory_space<vmem>>, %arg5: memref<3x1x1x256xf32, #tpu.memory_space<vmem>>, %arg6: memref<2x4x256xf32, #tpu.memory_space<vmem>>) attributes {dimension_semantics = [], scalar_prefetch = 0 : i64, scratch_operands = 0 : i64, tpu.core_type = #tpu.core_type<tc>} {
    %c0 = arith.constant 0 : index
    %c0_0 = arith.constant 0 : index
    %c0_1 = arith.constant 0 : index
    %0 = vector.load %arg0[%c0, %c0_0, %c0_1] : memref<2x4x256xf32, #tpu.memory_space<vmem>>, vector<2x4x256xf32>
    %1 = vector.extract_strided_slice %0 {offsets = [0, 0, 0], sizes = [2, 1, 256], strides = [1, 1, 1]} : vector<2x4x256xf32> to vector<2x1x256xf32>
    %c0_2 = arith.constant 0 : index
    %c0_3 = arith.constant 0 : index
    %c0_4 = arith.constant 0 : index
    %c0_5 = arith.constant 0 : index
    %2 = vector.load %arg1[%c0_2, %c0_3, %c0_4, %c0_5] : memref<4x1x12x256xf32, #tpu.memory_space<vmem>>, vector<1x1x12x256xf32>
    %3 = vector.shape_cast %2 : vector<1x1x12x256xf32> to vector<1x12x256xf32>
    %4 = vector.broadcast %1 : vector<2x1x256xf32> to vector<2x12x256xf32>
    %5 = vector.broadcast %3 : vector<1x12x256xf32> to vector<2x12x256xf32>
    %6 = arith.mulf %4, %5 : vector<2x12x256xf32>
    %7 = vector.extract_strided_slice %0 {offsets = [0, 1, 0], sizes = [2, 1, 256], strides = [1, 1, 1]} : vector<2x4x256xf32> to vector<2x1x256xf32>
    %c1 = arith.constant 1 : index
    %c0_6 = arith.constant 0 : index
    %c0_7 = arith.constant 0 : index
    %c0_8 = arith.constant 0 : index
    %8 = vector.load %arg1[%c1, %c0_6, %c0_7, %c0_8] : memref<4x1x12x256xf32, #tpu.memory_space<vmem>>, vector<1x1x12x256xf32>
    %9 = vector.shape_cast %8 : vector<1x1x12x256xf32> to vector<1x12x256xf32>
    %10 = vector.broadcast %7 : vector<2x1x256xf32> to vector<2x12x256xf32>
    %11 = vector.broadcast %9 : vector<1x12x256xf32> to vector<2x12x256xf32>
    %12 = arith.mulf %10, %11 : vector<2x12x256xf32>
    %13 = arith.addf %6, %12 : vector<2x12x256xf32>
    %14 = vector.extract_strided_slice %0 {offsets = [0, 2, 0], sizes = [2, 1, 256], strides = [1, 1, 1]} : vector<2x4x256xf32> to vector<2x1x256xf32>
    %c2 = arith.constant 2 : index
    %c0_9 = arith.constant 0 : index
    %c0_10 = arith.constant 0 : index
    %c0_11 = arith.constant 0 : index
    %15 = vector.load %arg1[%c2, %c0_9, %c0_10, %c0_11] : memref<4x1x12x256xf32, #tpu.memory_space<vmem>>, vector<1x1x12x256xf32>
    %16 = vector.shape_cast %15 : vector<1x1x12x256xf32> to vector<1x12x256xf32>
    %17 = vector.broadcast %14 : vector<2x1x256xf32> to vector<2x12x256xf32>
    %18 = vector.broadcast %16 : vector<1x12x256xf32> to vector<2x12x256xf32>
    %19 = arith.mulf %17, %18 : vector<2x12x256xf32>
    %20 = arith.addf %13, %19 : vector<2x12x256xf32>
    %21 = vector.extract_strided_slice %0 {offsets = [0, 3, 0], sizes = [2, 1, 256], strides = [1, 1, 1]} : vector<2x4x256xf32> to vector<2x1x256xf32>
    %c3 = arith.constant 3 : index
    %c0_12 = arith.constant 0 : index
    %c0_13 = arith.constant 0 : index
    %c0_14 = arith.constant 0 : index
    %22 = vector.load %arg1[%c3, %c0_12, %c0_13, %c0_14] : memref<4x1x12x256xf32, #tpu.memory_space<vmem>>, vector<1x1x12x256xf32>
    %23 = vector.shape_cast %22 : vector<1x1x12x256xf32> to vector<1x12x256xf32>
    %24 = vector.broadcast %21 : vector<2x1x256xf32> to vector<2x12x256xf32>
    %25 = vector.broadcast %23 : vector<1x12x256xf32> to vector<2x12x256xf32>
    %26 = arith.mulf %24, %25 : vector<2x12x256xf32>
    %27 = arith.addf %20, %26 : vector<2x12x256xf32>
    %cst = arith.constant dense<0.000000e+00> : vector<12xf32>
    %28 = vector.multi_reduction <add>, %27, %cst [0, 2] : vector<2x12x256xf32> to vector<12xf32>
    %29 = vector.shape_cast %28 : vector<12xf32> to vector<1x12x1xf32>
    %30 = arith.mulf %27, %27 : vector<2x12x256xf32>
    %cst_15 = arith.constant dense<0.000000e+00> : vector<12xf32>
    %31 = vector.multi_reduction <add>, %30, %cst_15 [0, 2] : vector<2x12x256xf32> to vector<12xf32>
    %32 = vector.shape_cast %31 : vector<12xf32> to vector<1x12x1xf32>
    %cst_16 = arith.constant 0.001953125 : f32
    %33 = vector.broadcast %cst_16 : f32 to vector<1x12x1xf32>
    %34 = arith.mulf %29, %33 : vector<1x12x1xf32>
    %cst_17 = arith.constant 0.001953125 : f32
    %35 = vector.broadcast %cst_17 : f32 to vector<1x12x1xf32>
    %36 = arith.mulf %32, %35 : vector<1x12x1xf32>
    %37 = arith.mulf %34, %34 : vector<1x12x1xf32>
    %38 = arith.subf %36, %37 : vector<1x12x1xf32>
    %cst_18 = arith.constant 0.000000e+00 : f32
    %39 = vector.broadcast %cst_18 : f32 to vector<1x12x1xf32>
    %40 = arith.maximumf %38, %39 : vector<1x12x1xf32>
    %41 = vector.broadcast %34 : vector<1x12x1xf32> to vector<2x12x256xf32>
    %42 = arith.subf %27, %41 : vector<2x12x256xf32>
    %cst_19 = arith.constant 9.99999974E-6 : f32
    %43 = vector.broadcast %cst_19 : f32 to vector<1x12x1xf32>
    %44 = arith.addf %40, %43 : vector<1x12x1xf32>
    %45 = math.rsqrt %44 : vector<1x12x1xf32>
    %46 = vector.broadcast %45 : vector<1x12x1xf32> to vector<2x12x256xf32>
    %47 = arith.mulf %42, %46 : vector<2x12x256xf32>
    %cst_20 = arith.constant 0.000000e+00 : f32
    %48 = vector.broadcast %cst_20 : f32 to vector<2x12x256xf32>
    %49 = arith.maximumf %47, %48 : vector<2x12x256xf32>
    %c1_i32 = arith.constant 1 : i32
    %50 = tpu.dynamic_rotate %49 by %c1_i32 dim 2 : vector<2x12x256xf32>, i32 -> vector<2x12x256xf32>
    %c0_21 = arith.constant 0 : index
    %c0_22 = arith.constant 0 : index
    %c0_23 = arith.constant 0 : index
    %c0_24 = arith.constant 0 : index
    %51 = vector.load %arg4[%c0_21, %c0_22, %c0_23, %c0_24] : memref<3x1x1x256xf32, #tpu.memory_space<vmem>>, vector<1x1x1x256xf32>
    %52 = vector.shape_cast %51 : vector<1x1x1x256xf32> to vector<1x1x256xf32>
    %53 = vector.broadcast %52 : vector<1x1x256xf32> to vector<2x12x256xf32>
    %54 = arith.mulf %50, %53 : vector<2x12x256xf32>
    %c255_i32 = arith.constant 255 : i32
    %55 = tpu.dynamic_rotate %49 by %c255_i32 dim 2 : vector<2x12x256xf32>, i32 -> vector<2x12x256xf32>
    %c2_25 = arith.constant 2 : index
    %c0_26 = arith.constant 0 : index
    %c0_27 = arith.constant 0 : index
    %c0_28 = arith.constant 0 : index
    %56 = vector.load %arg4[%c2_25, %c0_26, %c0_27, %c0_28] : memref<3x1x1x256xf32, #tpu.memory_space<vmem>>, vector<1x1x1x256xf32>
    %57 = vector.shape_cast %56 : vector<1x1x1x256xf32> to vector<1x1x256xf32>
    %58 = vector.broadcast %57 : vector<1x1x256xf32> to vector<2x12x256xf32>
    %59 = arith.mulf %55, %58 : vector<2x12x256xf32>
    %c0_29 = arith.constant 0 : index
    %c0_30 = arith.constant 0 : index
    %c0_31 = arith.constant 0 : index
    %c0_32 = arith.constant 0 : index
    %60 = vector.load %arg2[%c0_29, %c0_30, %c0_31, %c0_32] : memref<9x1x12x256xf32, #tpu.memory_space<vmem>>, vector<1x1x12x256xf32>
    %61 = vector.shape_cast %60 : vector<1x1x12x256xf32> to vector<1x12x256xf32>
    %62 = vector.broadcast %61 : vector<1x12x256xf32> to vector<2x12x256xf32>
    %63 = arith.mulf %54, %62 : vector<2x12x256xf32>
    %c1_33 = arith.constant 1 : index
    %c0_34 = arith.constant 0 : index
    %c0_35 = arith.constant 0 : index
    %c0_36 = arith.constant 0 : index
    %64 = vector.load %arg2[%c1_33, %c0_34, %c0_35, %c0_36] : memref<9x1x12x256xf32, #tpu.memory_space<vmem>>, vector<1x1x12x256xf32>
    %65 = vector.shape_cast %64 : vector<1x1x12x256xf32> to vector<1x12x256xf32>
    %66 = vector.broadcast %65 : vector<1x12x256xf32> to vector<2x12x256xf32>
    %67 = arith.mulf %49, %66 : vector<2x12x256xf32>
    %68 = arith.addf %63, %67 : vector<2x12x256xf32>
    %c2_37 = arith.constant 2 : index
    %c0_38 = arith.constant 0 : index
    %c0_39 = arith.constant 0 : index
    %c0_40 = arith.constant 0 : index
    %69 = vector.load %arg2[%c2_37, %c0_38, %c0_39, %c0_40] : memref<9x1x12x256xf32, #tpu.memory_space<vmem>>, vector<1x1x12x256xf32>
    %70 = vector.shape_cast %69 : vector<1x1x12x256xf32> to vector<1x12x256xf32>
    %71 = vector.broadcast %70 : vector<1x12x256xf32> to vector<2x12x256xf32>
    %72 = arith.mulf %59, %71 : vector<2x12x256xf32>
    %73 = arith.addf %68, %72 : vector<2x12x256xf32>
    %c16_i32 = arith.constant 16 : i32
    %74 = tpu.dynamic_rotate %73 by %c16_i32 dim 2 : vector<2x12x256xf32>, i32 -> vector<2x12x256xf32>
    %c0_41 = arith.constant 0 : index
    %c0_42 = arith.constant 0 : index
    %c0_43 = arith.constant 0 : index
    %c0_44 = arith.constant 0 : index
    %75 = vector.load %arg5[%c0_41, %c0_42, %c0_43, %c0_44] : memref<3x1x1x256xf32, #tpu.memory_space<vmem>>, vector<1x1x1x256xf32>
    %76 = vector.shape_cast %75 : vector<1x1x1x256xf32> to vector<1x1x256xf32>
    %77 = vector.broadcast %76 : vector<1x1x256xf32> to vector<2x12x256xf32>
    %78 = arith.mulf %74, %77 : vector<2x12x256xf32>
    %c3_45 = arith.constant 3 : index
    %c0_46 = arith.constant 0 : index
    %c0_47 = arith.constant 0 : index
    %c0_48 = arith.constant 0 : index
    %79 = vector.load %arg2[%c3_45, %c0_46, %c0_47, %c0_48] : memref<9x1x12x256xf32, #tpu.memory_space<vmem>>, vector<1x1x12x256xf32>
    %80 = vector.shape_cast %79 : vector<1x1x12x256xf32> to vector<1x12x256xf32>
    %81 = vector.broadcast %80 : vector<1x12x256xf32> to vector<2x12x256xf32>
    %82 = arith.mulf %54, %81 : vector<2x12x256xf32>
    %c4 = arith.constant 4 : index
    %c0_49 = arith.constant 0 : index
    %c0_50 = arith.constant 0 : index
    %c0_51 = arith.constant 0 : index
    %83 = vector.load %arg2[%c4, %c0_49, %c0_50, %c0_51] : memref<9x1x12x256xf32, #tpu.memory_space<vmem>>, vector<1x1x12x256xf32>
    %84 = vector.shape_cast %83 : vector<1x1x12x256xf32> to vector<1x12x256xf32>
    %85 = vector.broadcast %84 : vector<1x12x256xf32> to vector<2x12x256xf32>
    %86 = arith.mulf %49, %85 : vector<2x12x256xf32>
    %87 = arith.addf %82, %86 : vector<2x12x256xf32>
    %c5 = arith.constant 5 : index
    %c0_52 = arith.constant 0 : index
    %c0_53 = arith.constant 0 : index
    %c0_54 = arith.constant 0 : index
    %88 = vector.load %arg2[%c5, %c0_52, %c0_53, %c0_54] : memref<9x1x12x256xf32, #tpu.memory_space<vmem>>, vector<1x1x12x256xf32>
    %89 = vector.shape_cast %88 : vector<1x1x12x256xf32> to vector<1x12x256xf32>
    %90 = vector.broadcast %89 : vector<1x12x256xf32> to vector<2x12x256xf32>
    %91 = arith.mulf %59, %90 : vector<2x12x256xf32>
    %92 = arith.addf %87, %91 : vector<2x12x256xf32>
    %93 = arith.addf %78, %92 : vector<2x12x256xf32>
    %c6 = arith.constant 6 : index
    %c0_55 = arith.constant 0 : index
    %c0_56 = arith.constant 0 : index
    %c0_57 = arith.constant 0 : index
    %94 = vector.load %arg2[%c6, %c0_55, %c0_56, %c0_57] : memref<9x1x12x256xf32, #tpu.memory_space<vmem>>, vector<1x1x12x256xf32>
    %95 = vector.shape_cast %94 : vector<1x1x12x256xf32> to vector<1x12x256xf32>
    %96 = vector.broadcast %95 : vector<1x12x256xf32> to vector<2x12x256xf32>
    %97 = arith.mulf %54, %96 : vector<2x12x256xf32>
    %c7 = arith.constant 7 : index
    %c0_58 = arith.constant 0 : index
    %c0_59 = arith.constant 0 : index
    %c0_60 = arith.constant 0 : index
    %98 = vector.load %arg2[%c7, %c0_58, %c0_59, %c0_60] : memref<9x1x12x256xf32, #tpu.memory_space<vmem>>, vector<1x1x12x256xf32>
    %99 = vector.shape_cast %98 : vector<1x1x12x256xf32> to vector<1x12x256xf32>
    %100 = vector.broadcast %99 : vector<1x12x256xf32> to vector<2x12x256xf32>
    %101 = arith.mulf %49, %100 : vector<2x12x256xf32>
    %102 = arith.addf %97, %101 : vector<2x12x256xf32>
    %c8 = arith.constant 8 : index
    %c0_61 = arith.constant 0 : index
    %c0_62 = arith.constant 0 : index
    %c0_63 = arith.constant 0 : index
    %103 = vector.load %arg2[%c8, %c0_61, %c0_62, %c0_63] : memref<9x1x12x256xf32, #tpu.memory_space<vmem>>, vector<1x1x12x256xf32>
    %104 = vector.shape_cast %103 : vector<1x1x12x256xf32> to vector<1x12x256xf32>
    %105 = vector.broadcast %104 : vector<1x12x256xf32> to vector<2x12x256xf32>
    %106 = arith.mulf %59, %105 : vector<2x12x256xf32>
    %107 = arith.addf %102, %106 : vector<2x12x256xf32>
    %c240_i32 = arith.constant 240 : i32
    %108 = tpu.dynamic_rotate %107 by %c240_i32 dim 2 : vector<2x12x256xf32>, i32 -> vector<2x12x256xf32>
    %c2_64 = arith.constant 2 : index
    %c0_65 = arith.constant 0 : index
    %c0_66 = arith.constant 0 : index
    %c0_67 = arith.constant 0 : index
    %109 = vector.load %arg5[%c2_64, %c0_65, %c0_66, %c0_67] : memref<3x1x1x256xf32, #tpu.memory_space<vmem>>, vector<1x1x1x256xf32>
    %110 = vector.shape_cast %109 : vector<1x1x1x256xf32> to vector<1x1x256xf32>
    %111 = vector.broadcast %110 : vector<1x1x256xf32> to vector<2x12x256xf32>
    %112 = arith.mulf %108, %111 : vector<2x12x256xf32>
    %113 = arith.addf %93, %112 : vector<2x12x256xf32>
    %cst_68 = arith.constant dense<0.000000e+00> : vector<12xf32>
    %114 = vector.multi_reduction <add>, %113, %cst_68 [0, 2] : vector<2x12x256xf32> to vector<12xf32>
    %115 = vector.shape_cast %114 : vector<12xf32> to vector<1x12x1xf32>
    %116 = arith.mulf %113, %113 : vector<2x12x256xf32>
    %cst_69 = arith.constant dense<0.000000e+00> : vector<12xf32>
    %117 = vector.multi_reduction <add>, %116, %cst_69 [0, 2] : vector<2x12x256xf32> to vector<12xf32>
    %118 = vector.shape_cast %117 : vector<12xf32> to vector<1x12x1xf32>
    %cst_70 = arith.constant 0.001953125 : f32
    %119 = vector.broadcast %cst_70 : f32 to vector<1x12x1xf32>
    %120 = arith.mulf %115, %119 : vector<1x12x1xf32>
    %cst_71 = arith.constant 0.001953125 : f32
    %121 = vector.broadcast %cst_71 : f32 to vector<1x12x1xf32>
    %122 = arith.mulf %118, %121 : vector<1x12x1xf32>
    %123 = arith.mulf %120, %120 : vector<1x12x1xf32>
    %124 = arith.subf %122, %123 : vector<1x12x1xf32>
    %cst_72 = arith.constant 0.000000e+00 : f32
    %125 = vector.broadcast %cst_72 : f32 to vector<1x12x1xf32>
    %126 = arith.maximumf %124, %125 : vector<1x12x1xf32>
    %127 = vector.broadcast %120 : vector<1x12x1xf32> to vector<2x12x256xf32>
    %128 = arith.subf %113, %127 : vector<2x12x256xf32>
    %cst_73 = arith.constant 9.99999974E-6 : f32
    %129 = vector.broadcast %cst_73 : f32 to vector<1x12x1xf32>
    %130 = arith.addf %126, %129 : vector<1x12x1xf32>
    %131 = math.rsqrt %130 : vector<1x12x1xf32>
    %132 = vector.broadcast %131 : vector<1x12x1xf32> to vector<2x12x256xf32>
    %133 = arith.mulf %128, %132 : vector<2x12x256xf32>
    %cst_74 = arith.constant 0.000000e+00 : f32
    %134 = vector.broadcast %cst_74 : f32 to vector<2x12x256xf32>
    %135 = arith.maximumf %133, %134 : vector<2x12x256xf32>
    %136 = vector.extract_strided_slice %135 {offsets = [0, 0, 0], sizes = [2, 1, 256], strides = [1, 1, 1]} : vector<2x12x256xf32> to vector<2x1x256xf32>
    %c0_75 = arith.constant 0 : index
    %c0_76 = arith.constant 0 : index
    %c0_77 = arith.constant 0 : index
    %c0_78 = arith.constant 0 : index
    %137 = vector.load %arg3[%c0_75, %c0_76, %c0_77, %c0_78] : memref<12x1x4x256xf32, #tpu.memory_space<vmem>>, vector<1x1x4x256xf32>
    %138 = vector.shape_cast %137 : vector<1x1x4x256xf32> to vector<1x4x256xf32>
    %139 = vector.broadcast %136 : vector<2x1x256xf32> to vector<2x4x256xf32>
    %140 = vector.broadcast %138 : vector<1x4x256xf32> to vector<2x4x256xf32>
    %141 = arith.mulf %139, %140 : vector<2x4x256xf32>
    %142 = vector.extract_strided_slice %135 {offsets = [0, 1, 0], sizes = [2, 1, 256], strides = [1, 1, 1]} : vector<2x12x256xf32> to vector<2x1x256xf32>
    %c1_79 = arith.constant 1 : index
    %c0_80 = arith.constant 0 : index
    %c0_81 = arith.constant 0 : index
    %c0_82 = arith.constant 0 : index
    %143 = vector.load %arg3[%c1_79, %c0_80, %c0_81, %c0_82] : memref<12x1x4x256xf32, #tpu.memory_space<vmem>>, vector<1x1x4x256xf32>
    %144 = vector.shape_cast %143 : vector<1x1x4x256xf32> to vector<1x4x256xf32>
    %145 = vector.broadcast %142 : vector<2x1x256xf32> to vector<2x4x256xf32>
    %146 = vector.broadcast %144 : vector<1x4x256xf32> to vector<2x4x256xf32>
    %147 = arith.mulf %145, %146 : vector<2x4x256xf32>
    %148 = arith.addf %141, %147 : vector<2x4x256xf32>
    %149 = vector.extract_strided_slice %135 {offsets = [0, 2, 0], sizes = [2, 1, 256], strides = [1, 1, 1]} : vector<2x12x256xf32> to vector<2x1x256xf32>
    %c2_83 = arith.constant 2 : index
    %c0_84 = arith.constant 0 : index
    %c0_85 = arith.constant 0 : index
    %c0_86 = arith.constant 0 : index
    %150 = vector.load %arg3[%c2_83, %c0_84, %c0_85, %c0_86] : memref<12x1x4x256xf32, #tpu.memory_space<vmem>>, vector<1x1x4x256xf32>
    %151 = vector.shape_cast %150 : vector<1x1x4x256xf32> to vector<1x4x256xf32>
    %152 = vector.broadcast %149 : vector<2x1x256xf32> to vector<2x4x256xf32>
    %153 = vector.broadcast %151 : vector<1x4x256xf32> to vector<2x4x256xf32>
    %154 = arith.mulf %152, %153 : vector<2x4x256xf32>
    %155 = arith.addf %148, %154 : vector<2x4x256xf32>
    %156 = vector.extract_strided_slice %135 {offsets = [0, 3, 0], sizes = [2, 1, 256], strides = [1, 1, 1]} : vector<2x12x256xf32> to vector<2x1x256xf32>
    %c3_87 = arith.constant 3 : index
    %c0_88 = arith.constant 0 : index
    %c0_89 = arith.constant 0 : index
    %c0_90 = arith.constant 0 : index
    %157 = vector.load %arg3[%c3_87, %c0_88, %c0_89, %c0_90] : memref<12x1x4x256xf32, #tpu.memory_space<vmem>>, vector<1x1x4x256xf32>
    %158 = vector.shape_cast %157 : vector<1x1x4x256xf32> to vector<1x4x256xf32>
    %159 = vector.broadcast %156 : vector<2x1x256xf32> to vector<2x4x256xf32>
    %160 = vector.broadcast %158 : vector<1x4x256xf32> to vector<2x4x256xf32>
    %161 = arith.mulf %159, %160 : vector<2x4x256xf32>
    %162 = arith.addf %155, %161 : vector<2x4x256xf32>
    %163 = vector.extract_strided_slice %135 {offsets = [0, 4, 0], sizes = [2, 1, 256], strides = [1, 1, 1]} : vector<2x12x256xf32> to vector<2x1x256xf32>
    %c4_91 = arith.constant 4 : index
    %c0_92 = arith.constant 0 : index
    %c0_93 = arith.constant 0 : index
    %c0_94 = arith.constant 0 : index
    %164 = vector.load %arg3[%c4_91, %c0_92, %c0_93, %c0_94] : memref<12x1x4x256xf32, #tpu.memory_space<vmem>>, vector<1x1x4x256xf32>
    %165 = vector.shape_cast %164 : vector<1x1x4x256xf32> to vector<1x4x256xf32>
    %166 = vector.broadcast %163 : vector<2x1x256xf32> to vector<2x4x256xf32>
    %167 = vector.broadcast %165 : vector<1x4x256xf32> to vector<2x4x256xf32>
    %168 = arith.mulf %166, %167 : vector<2x4x256xf32>
    %169 = arith.addf %162, %168 : vector<2x4x256xf32>
    %170 = vector.extract_strided_slice %135 {offsets = [0, 5, 0], sizes = [2, 1, 256], strides = [1, 1, 1]} : vector<2x12x256xf32> to vector<2x1x256xf32>
    %c5_95 = arith.constant 5 : index
    %c0_96 = arith.constant 0 : index
    %c0_97 = arith.constant 0 : index
    %c0_98 = arith.constant 0 : index
    %171 = vector.load %arg3[%c5_95, %c0_96, %c0_97, %c0_98] : memref<12x1x4x256xf32, #tpu.memory_space<vmem>>, vector<1x1x4x256xf32>
    %172 = vector.shape_cast %171 : vector<1x1x4x256xf32> to vector<1x4x256xf32>
    %173 = vector.broadcast %170 : vector<2x1x256xf32> to vector<2x4x256xf32>
    %174 = vector.broadcast %172 : vector<1x4x256xf32> to vector<2x4x256xf32>
    %175 = arith.mulf %173, %174 : vector<2x4x256xf32>
    %176 = arith.addf %169, %175 : vector<2x4x256xf32>
    %177 = vector.extract_strided_slice %135 {offsets = [0, 6, 0], sizes = [2, 1, 256], strides = [1, 1, 1]} : vector<2x12x256xf32> to vector<2x1x256xf32>
    %c6_99 = arith.constant 6 : index
    %c0_100 = arith.constant 0 : index
    %c0_101 = arith.constant 0 : index
    %c0_102 = arith.constant 0 : index
    %178 = vector.load %arg3[%c6_99, %c0_100, %c0_101, %c0_102] : memref<12x1x4x256xf32, #tpu.memory_space<vmem>>, vector<1x1x4x256xf32>
    %179 = vector.shape_cast %178 : vector<1x1x4x256xf32> to vector<1x4x256xf32>
    %180 = vector.broadcast %177 : vector<2x1x256xf32> to vector<2x4x256xf32>
    %181 = vector.broadcast %179 : vector<1x4x256xf32> to vector<2x4x256xf32>
    %182 = arith.mulf %180, %181 : vector<2x4x256xf32>
    %183 = arith.addf %176, %182 : vector<2x4x256xf32>
    %184 = vector.extract_strided_slice %135 {offsets = [0, 7, 0], sizes = [2, 1, 256], strides = [1, 1, 1]} : vector<2x12x256xf32> to vector<2x1x256xf32>
    %c7_103 = arith.constant 7 : index
    %c0_104 = arith.constant 0 : index
    %c0_105 = arith.constant 0 : index
    %c0_106 = arith.constant 0 : index
    %185 = vector.load %arg3[%c7_103, %c0_104, %c0_105, %c0_106] : memref<12x1x4x256xf32, #tpu.memory_space<vmem>>, vector<1x1x4x256xf32>
    %186 = vector.shape_cast %185 : vector<1x1x4x256xf32> to vector<1x4x256xf32>
    %187 = vector.broadcast %184 : vector<2x1x256xf32> to vector<2x4x256xf32>
    %188 = vector.broadcast %186 : vector<1x4x256xf32> to vector<2x4x256xf32>
    %189 = arith.mulf %187, %188 : vector<2x4x256xf32>
    %190 = arith.addf %183, %189 : vector<2x4x256xf32>
    %191 = vector.extract_strided_slice %135 {offsets = [0, 8, 0], sizes = [2, 1, 256], strides = [1, 1, 1]} : vector<2x12x256xf32> to vector<2x1x256xf32>
    %c8_107 = arith.constant 8 : index
    %c0_108 = arith.constant 0 : index
    %c0_109 = arith.constant 0 : index
    %c0_110 = arith.constant 0 : index
    %192 = vector.load %arg3[%c8_107, %c0_108, %c0_109, %c0_110] : memref<12x1x4x256xf32, #tpu.memory_space<vmem>>, vector<1x1x4x256xf32>
    %193 = vector.shape_cast %192 : vector<1x1x4x256xf32> to vector<1x4x256xf32>
    %194 = vector.broadcast %191 : vector<2x1x256xf32> to vector<2x4x256xf32>
    %195 = vector.broadcast %193 : vector<1x4x256xf32> to vector<2x4x256xf32>
    %196 = arith.mulf %194, %195 : vector<2x4x256xf32>
    %197 = arith.addf %190, %196 : vector<2x4x256xf32>
    %198 = vector.extract_strided_slice %135 {offsets = [0, 9, 0], sizes = [2, 1, 256], strides = [1, 1, 1]} : vector<2x12x256xf32> to vector<2x1x256xf32>
    %c9 = arith.constant 9 : index
    %c0_111 = arith.constant 0 : index
    %c0_112 = arith.constant 0 : index
    %c0_113 = arith.constant 0 : index
    %199 = vector.load %arg3[%c9, %c0_111, %c0_112, %c0_113] : memref<12x1x4x256xf32, #tpu.memory_space<vmem>>, vector<1x1x4x256xf32>
    %200 = vector.shape_cast %199 : vector<1x1x4x256xf32> to vector<1x4x256xf32>
    %201 = vector.broadcast %198 : vector<2x1x256xf32> to vector<2x4x256xf32>
    %202 = vector.broadcast %200 : vector<1x4x256xf32> to vector<2x4x256xf32>
    %203 = arith.mulf %201, %202 : vector<2x4x256xf32>
    %204 = arith.addf %197, %203 : vector<2x4x256xf32>
    %205 = vector.extract_strided_slice %135 {offsets = [0, 10, 0], sizes = [2, 1, 256], strides = [1, 1, 1]} : vector<2x12x256xf32> to vector<2x1x256xf32>
    %c10 = arith.constant 10 : index
    %c0_114 = arith.constant 0 : index
    %c0_115 = arith.constant 0 : index
    %c0_116 = arith.constant 0 : index
    %206 = vector.load %arg3[%c10, %c0_114, %c0_115, %c0_116] : memref<12x1x4x256xf32, #tpu.memory_space<vmem>>, vector<1x1x4x256xf32>
    %207 = vector.shape_cast %206 : vector<1x1x4x256xf32> to vector<1x4x256xf32>
    %208 = vector.broadcast %205 : vector<2x1x256xf32> to vector<2x4x256xf32>
    %209 = vector.broadcast %207 : vector<1x4x256xf32> to vector<2x4x256xf32>
    %210 = arith.mulf %208, %209 : vector<2x4x256xf32>
    %211 = arith.addf %204, %210 : vector<2x4x256xf32>
    %212 = vector.extract_strided_slice %135 {offsets = [0, 11, 0], sizes = [2, 1, 256], strides = [1, 1, 1]} : vector<2x12x256xf32> to vector<2x1x256xf32>
    %c11 = arith.constant 11 : index
    %c0_117 = arith.constant 0 : index
    %c0_118 = arith.constant 0 : index
    %c0_119 = arith.constant 0 : index
    %213 = vector.load %arg3[%c11, %c0_117, %c0_118, %c0_119] : memref<12x1x4x256xf32, #tpu.memory_space<vmem>>, vector<1x1x4x256xf32>
    %214 = vector.shape_cast %213 : vector<1x1x4x256xf32> to vector<1x4x256xf32>
    %215 = vector.broadcast %212 : vector<2x1x256xf32> to vector<2x4x256xf32>
    %216 = vector.broadcast %214 : vector<1x4x256xf32> to vector<2x4x256xf32>
    %217 = arith.mulf %215, %216 : vector<2x4x256xf32>
    %218 = arith.addf %211, %217 : vector<2x4x256xf32>
    %cst_120 = arith.constant dense<0.000000e+00> : vector<4xf32>
    %219 = vector.multi_reduction <add>, %218, %cst_120 [0, 2] : vector<2x4x256xf32> to vector<4xf32>
    %220 = vector.shape_cast %219 : vector<4xf32> to vector<1x4x1xf32>
    %221 = arith.mulf %218, %218 : vector<2x4x256xf32>
    %cst_121 = arith.constant dense<0.000000e+00> : vector<4xf32>
    %222 = vector.multi_reduction <add>, %221, %cst_121 [0, 2] : vector<2x4x256xf32> to vector<4xf32>
    %223 = vector.shape_cast %222 : vector<4xf32> to vector<1x4x1xf32>
    %cst_122 = arith.constant 0.001953125 : f32
    %224 = vector.broadcast %cst_122 : f32 to vector<1x4x1xf32>
    %225 = arith.mulf %220, %224 : vector<1x4x1xf32>
    %cst_123 = arith.constant 0.001953125 : f32
    %226 = vector.broadcast %cst_123 : f32 to vector<1x4x1xf32>
    %227 = arith.mulf %223, %226 : vector<1x4x1xf32>
    %228 = arith.mulf %225, %225 : vector<1x4x1xf32>
    %229 = arith.subf %227, %228 : vector<1x4x1xf32>
    %cst_124 = arith.constant 0.000000e+00 : f32
    %230 = vector.broadcast %cst_124 : f32 to vector<1x4x1xf32>
    %231 = arith.maximumf %229, %230 : vector<1x4x1xf32>
    %232 = vector.broadcast %225 : vector<1x4x1xf32> to vector<2x4x256xf32>
    %233 = arith.subf %218, %232 : vector<2x4x256xf32>
    %cst_125 = arith.constant 9.99999974E-6 : f32
    %234 = vector.broadcast %cst_125 : f32 to vector<1x4x1xf32>
    %235 = arith.addf %231, %234 : vector<1x4x1xf32>
    %236 = math.rsqrt %235 : vector<1x4x1xf32>
    %237 = vector.broadcast %236 : vector<1x4x1xf32> to vector<2x4x256xf32>
    %238 = arith.mulf %233, %237 : vector<2x4x256xf32>
    %239 = arith.addf %238, %0 : vector<2x4x256xf32>
    %c0_126 = arith.constant 0 : index
    %c0_127 = arith.constant 0 : index
    %c0_128 = arith.constant 0 : index
    %240 = vector.load %arg6[%c0_126, %c0_127, %c0_128] : memref<2x4x256xf32, #tpu.memory_space<vmem>>, vector<2x4x256xf32>
    tpu.vector_store %arg6[%c0_126, %c0_127, %c0_128], %239 {strides = array<i32>} : memref<2x4x256xf32, #tpu.memory_space<vmem>>, vector<2x4x256xf32>,
    return
  }
}

</mosaic_0001>

<llo_original>
// kernel: tpu_custom_call.1
$region0: #{tpu_custom_call.1}
  #allocation0 [shape = 'u32[]', space=smem, size = 0x4, offset = 0x4, fixed_abs, tag = 'smem constant byte address 0x4 - core index']
  #allocation1 [shape = 'u32[72,128]{1,0:T(1,128)}', space=vmem, size = 0x9000, scoped, tag = 'internal scratch']
  %s0 = inlined_call_operand.vmem [shape: f32[2,4,256], index: 0, kind: input, shape index: {}]
  %s1 = inlined_call_operand.vmem [shape: f32[4,1,12,256], index: 1, kind: input, shape index: {}]
  %s2 = inlined_call_operand.vmem [shape: f32[9,1,12,256], index: 2, kind: input, shape index: {}]
  %s3 = inlined_call_operand.vmem [shape: f32[12,1,4,256], index: 3, kind: input, shape index: {}]
  %s4 = inlined_call_operand.vmem [shape: f32[3,1,1,256], index: 4, kind: input, shape index: {}]
  %s5 = inlined_call_operand.vmem [shape: f32[3,1,1,256], index: 5, kind: input, shape index: {}]
  %s6 = inlined_call_operand.hbm [shape: f32[2,4,256], index: 6, kind: output, shape index: {}]
  %s7 = sld [smem:[#allocation0]]
  $region34: #{tpu_custom_call.1} parent=0
    _
  %s9 = ssub.s32 1, %s7
  %s10 = scalar_select 0, %s9, %s7
  $region1: #{tpu_custom_call.1} parent=0
    #allocation2 [shape = 'u8[8192]{0}', space=vmem, size = 0x2000, scoped, tag = 'output window, operand 0, single buffered']
    #allocation3 [shape = 's32[1]{0}', space=sflag, size = 0x4, scoped, tag = 'scoped memory for tpu_custom_call.1']
    %11 = vsyncpa [#allocation3], 0
    // Predicated region
    $region2: #{tpu_custom_call.1} parent=1 // pred_check
      _
    $region3: #{tpu_custom_call.1} parent=1 // pred_check_branch
      %13 = sbr.rel (0) target = $region5
    $region4: #{tpu_custom_call.1} parent=1 // pred_region
      _
    $region5: #{tpu_custom_call.1} parent=1 // pred_fallthru
      _
    // Predicated region
    $region6: #{tpu_custom_call.1} parent=1 // pred_check
      _
    $region7: #{tpu_custom_call.1} parent=1 // pred_check_branch
      %15 = sbr.rel (0) target = $region9
    $region8: #{tpu_custom_call.1} parent=1 // pred_region
      _
    $region9: #{tpu_custom_call.1} parent=1 // pred_fallthru
      _
    // Predicated region
    $region10: #{tpu_custom_call.1} parent=1 // pred_check
      _
    $region11: #{tpu_custom_call.1} parent=1 // pred_check_branch
      %17 = sbr.rel (0) target = $region13
    $region12: #{tpu_custom_call.1} parent=1 // pred_region
      _
    $region13: #{tpu_custom_call.1} parent=1 // pred_fallthru
      _
    // Predicated region
    $region14: #{tpu_custom_call.1} parent=1 // pred_check
      _
    $region15: #{tpu_custom_call.1} parent=1 // pred_check_branch
      %19 = sbr.rel (0) target = $region17
    $region16: #{tpu_custom_call.1} parent=1 // pred_region
      _
    $region17: #{tpu_custom_call.1} parent=1 // pred_fallthru
      _
    // Predicated region
    $region18: #{tpu_custom_call.1} parent=1 // pred_check
      _
    $region19: #{tpu_custom_call.1} parent=1 // pred_check_branch
      %21 = sbr.rel (0) target = $region21
    $region20: #{tpu_custom_call.1} parent=1 // pred_region
      _
    $region21: #{tpu_custom_call.1} parent=1 // pred_fallthru
      _
    // Predicated region
    $region22: #{tpu_custom_call.1} parent=1 // pred_check
      _
    $region23: #{tpu_custom_call.1} parent=1 // pred_check_branch
      %23 = sbr.rel (0) target = $region25
    $region24: #{tpu_custom_call.1} parent=1 // pred_region
      _
    $region25: #{tpu_custom_call.1} parent=1 // pred_fallthru
      _
    %v24 = vld [vmem:[%s0] sm:$0xff]
    %v25 = vld [vmem:[%s0 + $0x8] sm:$0xff]
    %v26 = vld [vmem:[%s1] sm:$0xff]
    %v27 = vld [vmem:[%s1 + $0x8] sm:$0xff]
    %v28 = vld [vmem:[%s1 + $0x10] sm:$0xf]
    %v29 = vld [vmem:[%s1 + $0x18] sm:$0xf]
    %v32 = vperm.slane %v24, 0
    %v33 = vperm.slane %v24, 4
    %v34 = vperm.slane %v25, 0
    %v35 = vperm.slane %v25, 4
    %v40 = vperm.slane %v32, 0
    %v41 = vperm.slane %v33, 0
    %v42 = vperm.slane %v34, 0
    %v43 = vperm.slane %v35, 0
    %v44 = vmul.f32 %v40, %v26
    %v45 = vmul.f32 %v41, %v27
    %v46 = vmul.f32 %v40, %v28
    %v47 = vmul.f32 %v41, %v29
    %v48 = vmul.f32 %v42, %v26
    %v49 = vmul.f32 %v43, %v27
    %v50 = vmul.f32 %v42, %v28
    %v51 = vmul.f32 %v43, %v29
    %s52 = scalar_lea.vmem %s1, 32
    %v53 = vld [vmem:[%s52] sm:$0xff]
    %v54 = vld [vmem:[%s52 + $0x8] sm:$0xff]
    %v55 = vld [vmem:[%s52 + $0x10] sm:$0xf]
    %v56 = vld [vmem:[%s52 + $0x18] sm:$0xf]
    %v57 = vperm.slane %v24, 1
    %v58 = vperm.slane %v24, 5
    %v59 = vperm.slane %v25, 1
    %v60 = vperm.slane %v25, 5
    %v65 = vperm.slane %v57, 1
    %v66 = vperm.slane %v58, 1
    %v67 = vperm.slane %v59, 1
    %v68 = vperm.slane %v60, 1
    %v69 = vmul.f32 %v65, %v53
    %v70 = vmul.f32 %v66, %v54
    %v71 = vmul.f32 %v65, %v55
    %v72 = vmul.f32 %v66, %v56
    %v73 = vmul.f32 %v67, %v53
    %v74 = vmul.f32 %v68, %v54
    %v75 = vmul.f32 %v67, %v55
    %v76 = vmul.f32 %v68, %v56
    %v77 = vadd.f32 %v44, %v69
    %v78 = vadd.f32 %v45, %v70
    %v79 = vadd.f32 %v46, %v71
    %v80 = vadd.f32 %v47, %v72
    %v81 = vadd.f32 %v48, %v73
    %v82 = vadd.f32 %v49, %v74
    %v83 = vadd.f32 %v50, %v75
    %v84 = vadd.f32 %v51, %v76
    %s85 = scalar_lea.vmem %s1, 64
    %v86 = vld [vmem:[%s85] sm:$0xff]
    %v87 = vld [vmem:[%s85 + $0x8] sm:$0xff]
    %v88 = vld [vmem:[%s85 + $0x10] sm:$0xf]
    %v89 = vld [vmem:[%s85 + $0x18] sm:$0xf]
    %v90 = vperm.slane %v24, 2
    %v91 = vperm.slane %v24, 6
    %v92 = vperm.slane %v25, 2
    %v93 = vperm.slane %v25, 6
    %v98 = vperm.slane %v90, 2
    %v99 = vperm.slane %v91, 2
    %v100 = vperm.slane %v92, 2
    %v101 = vperm.slane %v93, 2
    %v102 = vmul.f32 %v98, %v86
    %v103 = vmul.f32 %v99, %v87
    %v104 = vmul.f32 %v98, %v88
    %v105 = vmul.f32 %v99, %v89
    %v106 = vmul.f32 %v100, %v86
    %v107 = vmul.f32 %v101, %v87
    %v108 = vmul.f32 %v100, %v88
    %v109 = vmul.f32 %v101, %v89
    %v110 = vadd.f32 %v77, %v102
    %v111 = vadd.f32 %v78, %v103
    %v112 = vadd.f32 %v79, %v104
    %v113 = vadd.f32 %v80, %v105
    %v114 = vadd.f32 %v81, %v106
    %v115 = vadd.f32 %v82, %v107
    %v116 = vadd.f32 %v83, %v108
    %v117 = vadd.f32 %v84, %v109
    %s118 = scalar_lea.vmem %s1, 96
    %v119 = vld [vmem:[%s118] sm:$0xff]
    %v120 = vld [vmem:[%s118 + $0x8] sm:$0xff]
    %v121 = vld [vmem:[%s118 + $0x10] sm:$0xf]
    %v122 = vld [vmem:[%s118 + $0x18] sm:$0xf]
    %v123 = vperm.slane %v24, 3
    %v124 = vperm.slane %v24, 7
    %v125 = vperm.slane %v25, 3
    %v126 = vperm.slane %v25, 7
    %v131 = vperm.slane %v123, 3
    %v132 = vperm.slane %v124, 3
    %v133 = vperm.slane %v125, 3
    %v134 = vperm.slane %v126, 3
    %v135 = vmul.f32 %v131, %v119
    %v136 = vmul.f32 %v132, %v120
    %v137 = vmul.f32 %v131, %v121
    %v138 = vmul.f32 %v132, %v122
    %v139 = vmul.f32 %v133, %v119
    %v140 = vmul.f32 %v134, %v120
    %v141 = vmul.f32 %v133, %v121
    %v142 = vmul.f32 %v134, %v122
    %v143 = vadd.f32 %v110, %v135
    %v144 = vadd.f32 %v111, %v136
    %v145 = vadd.f32 %v112, %v137
    %v146 = vadd.f32 %v113, %v138
    %v147 = vadd.f32 %v114, %v139
    %v148 = vadd.f32 %v115, %v140
    %v149 = vadd.f32 %v116, %v141
    %v150 = vadd.f32 %v117, %v142
    %v151 = vadd.f32 %v143, %v144
    %v152 = vadd.f32 %v151, %v147
    %v153 = vadd.f32 %v152, %v148
    %154 = vadd.xlane.f32.xlu0 %v153
    %v155 = vpop.xlane.xlu0 %154
    %vm156 = vcmask 1043456
    %v157 = vsel %vm156, %v145, 0.0
    %v158 = vsel %vm156, %v146, 0.0
    %v159 = vadd.f32 %v157, %v158
    %v160 = vsel %vm156, %v149, 0.0
    %v161 = vadd.f32 %v159, %v160
    %v162 = vsel %vm156, %v150, 0.0
    %v163 = vadd.f32 %v161, %v162
    %164 = vadd.xlane.f32.xlu0 %v163
    %v165 = vpop.xlane.xlu0 %164
    %v166 = vmul.f32 %v143, %v143
    %v167 = vmul.f32 %v144, %v144
    %v168 = vmul.f32 %v145, %v145
    %v169 = vmul.f32 %v146, %v146
    %v170 = vmul.f32 %v147, %v147
    %v171 = vmul.f32 %v148, %v148
    %v172 = vmul.f32 %v149, %v149
    %v173 = vmul.f32 %v150, %v150
    %v174 = vadd.f32 %v166, %v167
    %v175 = vadd.f32 %v174, %v170
    %v176 = vadd.f32 %v175, %v171
    %177 = vadd.xlane.f32.xlu0 %v176
    %v178 = vpop.xlane.xlu0 %177
    %v179 = vsel %vm156, %v168, 0.0
    %v180 = vsel %vm156, %v169, 0.0
    %v181 = vadd.f32 %v179, %v180
    %v182 = vsel %vm156, %v172, 0.0
    %v183 = vadd.f32 %v181, %v182
    %v184 = vsel %vm156, %v173, 0.0
    %v185 = vadd.f32 %v183, %v184
    %186 = vadd.xlane.f32.xlu0 %v185
    %v187 = vpop.xlane.xlu0 %186
    %v188 = vmul.f32 %v155, 0.001953125
    %v189 = vmul.f32 %v165, 0.001953125
    %v190 = vmul.f32 %v178, 0.001953125
    %v191 = vmul.f32 %v187, 0.001953125
    %v192 = vmul.f32 %v188, %v188
    %v193 = vmul.f32 %v189, %v189
    %v194 = vsub.f32 %v190, %v192
    %v195 = vsub.f32 %v191, %v193
    %v196 = vmax.f32 %v194, 0.0
    %v197 = vmax.f32 %v195, 0.0
    %v198 = vsub.f32 %v143, %v188
    %v199 = vsub.f32 %v144, %v188
    %v200 = vsub.f32 %v145, %v189
    %v201 = vsub.f32 %v146, %v189
    %v202 = vsub.f32 %v147, %v188
    %v203 = vsub.f32 %v148, %v188
    %v204 = vsub.f32 %v149, %v189
    %v205 = vsub.f32 %v150, %v189
    %v206 = vadd.f32 %v196, 1e-05
    %v207 = vadd.f32 %v197, 1e-05
    %v208 = vrsqrt.pop %v206
    %v209 = vmul.f32 %v208, %v206
    %v210 = vmul.f32 %v209, %v208
    %v211 = vmul.f32 0.5, %v210
    %v212 = vsub.f32 1.5, %v211
    %v213 = vmul.f32 %v208, %v212
    %vm214 = vweird.f32 %v206
    %vm215 = vweird.f32 %v208
    %vm216 = vmor %vm214, %vm215
    %v217 = vsel %vm216, %v208, %v213
    %v218 = vrsqrt.pop %v207
    %v219 = vmul.f32 %v218, %v207
    %v220 = vmul.f32 %v219, %v218
    %v221 = vmul.f32 0.5, %v220
    %v222 = vsub.f32 1.5, %v221
    %v223 = vmul.f32 %v218, %v222
    %vm224 = vweird.f32 %v207
    %vm225 = vweird.f32 %v218
    %vm226 = vmor %vm224, %vm225
    %v227 = vsel %vm226, %v218, %v223
    %v228 = vmul.f32 %v198, %v217
    %v229 = vmul.f32 %v199, %v217
    %v230 = vmul.f32 %v200, %v227
    %v231 = vmul.f32 %v201, %v227
    %v232 = vmul.f32 %v202, %v217
    %v233 = vmul.f32 %v203, %v217
    %v234 = vmul.f32 %v204, %v227
    %v235 = vmul.f32 %v205, %v227
    %v236 = vmax.f32 %v228, 0.0
    %v237 = vmax.f32 %v229, 0.0
    %v238 = vmax.f32 %v230, 0.0
    %v239 = vmax.f32 %v231, 0.0
    %v240 = vmax.f32 %v232, 0.0
    %v241 = vmax.f32 %v233, 0.0
    %v242 = vmax.f32 %v234, 0.0
    %v243 = vmax.f32 %v235, 0.0
    %244 = vrot.lane.b32.xlu0 %v236, 1
    %v245 = vpop.permute.xlu0 %244
    %246 = vrot.lane.b32.xlu0 %v238, 1
    %v247 = vpop.permute.xlu0 %246
    %248 = vrot.lane.b32.xlu0 %v240, 1
    %v249 = vpop.permute.xlu0 %248
    %250 = vrot.lane.b32.xlu0 %v242, 1
    %v251 = vpop.permute.xlu0 %250
    %252 = vrot.lane.b32.xlu0 %v237, 1
    %v253 = vpop.permute.xlu0 %252
    %254 = vrot.lane.b32.xlu0 %v239, 1
    %v255 = vpop.permute.xlu0 %254
    %256 = vrot.lane.b32.xlu0 %v241, 1
    %v257 = vpop.permute.xlu0 %256
    %258 = vrot.lane.b32.xlu0 %v243, 1
    %v259 = vpop.permute.xlu0 %258
    %v260 = vlaneseq
    %v261 = vand.u32 %v260, 127
    %vm262 = vcmp.lt.s32.totalorder %v261, 1
    %v263 = vsel %vm262, %v245, %v253
    %v264 = vsel %vm262, %v247, %v255
    %v265 = vsel %vm262, %v249, %v257
    %v266 = vsel %vm262, %v251, %v259
    %v267 = vsel %vm262, %v253, %v245
    %v268 = vsel %vm262, %v255, %v247
    %v269 = vsel %vm262, %v257, %v249
    %v270 = vsel %vm262, %v259, %v251
    %v271 = vld [vmem:[%s4] sm:$0x3]
    %v273 = vperm.slane %v271, 0
    %v274 = vperm.slane %v271, 1
    %v277 = vmul.f32 %v267, %v273
    %v278 = vmul.f32 %v263, %v274
    %v279 = vmul.f32 %v268, %v273
    %v280 = vmul.f32 %v264, %v274
    %v281 = vmul.f32 %v269, %v273
    %v282 = vmul.f32 %v265, %v274
    %v283 = vmul.f32 %v270, %v273
    %v284 = vmul.f32 %v266, %v274
    %285 = vrot.lane.b32.xlu0 %v236, 127
    %v286 = vpop.permute.xlu0 %285
    %287 = vrot.lane.b32.xlu0 %v238, 127
    %v288 = vpop.permute.xlu0 %287
    %289 = vrot.lane.b32.xlu0 %v240, 127
    %v290 = vpop.permute.xlu0 %289
    %291 = vrot.lane.b32.xlu0 %v242, 127
    %v292 = vpop.permute.xlu0 %291
    %293 = vrot.lane.b32.xlu0 %v237, 127
    %v294 = vpop.permute.xlu0 %293
    %295 = vrot.lane.b32.xlu0 %v239, 127
    %v296 = vpop.permute.xlu0 %295
    %297 = vrot.lane.b32.xlu0 %v241, 127
    %v298 = vpop.permute.xlu0 %297
    %299 = vrot.lane.b32.xlu0 %v243, 127
    %v300 = vpop.permute.xlu0 %299
    %vm301 = vcmp.lt.s32.totalorder %v261, 127
    %v302 = vsel %vm301, %v286, %v294
    %v303 = vsel %vm301, %v288, %v296
    %v304 = vsel %vm301, %v290, %v298
    %v305 = vsel %vm301, %v292, %v300
    %v306 = vsel %vm301, %v294, %v286
    %v307 = vsel %vm301, %v296, %v288
    %v308 = vsel %vm301, %v298, %v290
    %v309 = vsel %vm301, %v300, %v292
    %s310 = scalar_lea.vmem %s4, 4
    %v311 = vld [vmem:[%s310] sm:$0x3]
    %v313 = vperm.slane %v311, 0
    %v314 = vperm.slane %v311, 1
    %v317 = vmul.f32 %v302, %v313
    %v318 = vmul.f32 %v306, %v314
    %v319 = vmul.f32 %v303, %v313
    %v320 = vmul.f32 %v307, %v314
    %v321 = vmul.f32 %v304, %v313
    %v322 = vmul.f32 %v308, %v314
    %v323 = vmul.f32 %v305, %v313
    %v324 = vmul.f32 %v309, %v314
    %v325 = vld [vmem:[%s2] sm:$0xff]
    %v326 = vld [vmem:[%s2 + $0x8] sm:$0xff]
    %v327 = vld [vmem:[%s2 + $0x10] sm:$0xf]
    %v328 = vld [vmem:[%s2 + $0x18] sm:$0xf]
    %v329 = vmul.f32 %v277, %v325
    %v330 = vmul.f32 %v278, %v326
    %v331 = vmul.f32 %v279, %v327
    %v332 = vmul.f32 %v280, %v328
    %v333 = vmul.f32 %v281, %v325
    %v334 = vmul.f32 %v282, %v326
    %v335 = vmul.f32 %v283, %v327
    %v336 = vmul.f32 %v284, %v328
    %s337 = scalar_lea.vmem %s2, 32
    %v338 = vld [vmem:[%s337] sm:$0xff]
    %v339 = vld [vmem:[%s337 + $0x8] sm:$0xff]
    %v340 = vld [vmem:[%s337 + $0x10] sm:$0xf]
    %v341 = vld [vmem:[%s337 + $0x18] sm:$0xf]
    %v342 = vmul.f32 %v236, %v338
    %v343 = vmul.f32 %v237, %v339
    %v344 = vmul.f32 %v238, %v340
    %v345 = vmul.f32 %v239, %v341
    %v346 = vmul.f32 %v240, %v338
    %v347 = vmul.f32 %v241, %v339
    %v348 = vmul.f32 %v242, %v340
    %v349 = vmul.f32 %v243, %v341
    %v350 = vadd.f32 %v329, %v342
    %v351 = vadd.f32 %v330, %v343
    %v352 = vadd.f32 %v331, %v344
    %v353 = vadd.f32 %v332, %v345
    %v354 = vadd.f32 %v333, %v346
    %v355 = vadd.f32 %v334, %v347
    %v356 = vadd.f32 %v335, %v348
    %v357 = vadd.f32 %v336, %v349
    %s358 = scalar_lea.vmem %s2, 64
    %v359 = vld [vmem:[%s358] sm:$0xff]
    %v360 = vld [vmem:[%s358 + $0x8] sm:$0xff]
    %v361 = vld [vmem:[%s358 + $0x10] sm:$0xf]
    %v362 = vld [vmem:[%s358 + $0x18] sm:$0xf]
    %v363 = vmul.f32 %v317, %v359
    %v364 = vmul.f32 %v318, %v360
    %v365 = vmul.f32 %v319, %v361
    %v366 = vmul.f32 %v320, %v362
    %v367 = vmul.f32 %v321, %v359
    %v368 = vmul.f32 %v322, %v360
    %v369 = vmul.f32 %v323, %v361
    %v370 = vmul.f32 %v324, %v362
    %v371 = vadd.f32 %v350, %v363
    %v372 = vadd.f32 %v351, %v364
    %v373 = vadd.f32 %v352, %v365
    %v374 = vadd.f32 %v353, %v366
    %v375 = vadd.f32 %v354, %v367
    %v376 = vadd.f32 %v355, %v368
    %v377 = vadd.f32 %v356, %v369
    %v378 = vadd.f32 %v357, %v370
    %379 = vrot.lane.b32.xlu0 %v371, 16
    %v380 = vpop.permute.xlu0 %379
    %381 = vrot.lane.b32.xlu0 %v373, 16
    %v382 = vpop.permute.xlu0 %381
    %383 = vrot.lane.b32.xlu0 %v375, 16
    %v384 = vpop.permute.xlu0 %383
    %385 = vrot.lane.b32.xlu0 %v377, 16
    %v386 = vpop.permute.xlu0 %385
    %387 = vrot.lane.b32.xlu0 %v372, 16
    %v388 = vpop.permute.xlu0 %387
    %389 = vrot.lane.b32.xlu0 %v374, 16
    %v390 = vpop.permute.xlu0 %389
    %391 = vrot.lane.b32.xlu0 %v376, 16
    %v392 = vpop.permute.xlu0 %391
    %393 = vrot.lane.b32.xlu0 %v378, 16
    %v394 = vpop.permute.xlu0 %393
    %vm395 = vcmp.lt.s32.totalorder %v261, 16
    %v396 = vsel %vm395, %v380, %v388
    %v397 = vsel %vm395, %v382, %v390
    %v398 = vsel %vm395, %v384, %v392
    %v399 = vsel %vm395, %v386, %v394
    %v400 = vsel %vm395, %v388, %v380
    %v401 = vsel %vm395, %v390, %v382
    %v402 = vsel %vm395, %v392, %v384
    %v403 = vsel %vm395, %v394, %v386
    %v404 = vld [vmem:[%s5] sm:$0x3]
    %v406 = vperm.slane %v404, 0
    %v407 = vperm.slane %v404, 1
    %v410 = vmul.f32 %v400, %v406
    %v411 = vmul.f32 %v396, %v407
    %v412 = vmul.f32 %v401, %v406
    %v413 = vmul.f32 %v397, %v407
    %v414 = vmul.f32 %v402, %v406
    %v415 = vmul.f32 %v398, %v407
    %v416 = vmul.f32 %v403, %v406
    %v417 = vmul.f32 %v399, %v407
    %s418 = scalar_lea.vmem %s2, 96
    %v419 = vld [vmem:[%s418] sm:$0xff]
    %v420 = vld [vmem:[%s418 + $0x8] sm:$0xff]
    %v421 = vld [vmem:[%s418 + $0x10] sm:$0xf]
    %v422 = vld [vmem:[%s418 + $0x18] sm:$0xf]
    %v423 = vmul.f32 %v277, %v419
    %v424 = vmul.f32 %v278, %v420
    %v425 = vmul.f32 %v279, %v421
    %v426 = vmul.f32 %v280, %v422
    %v427 = vmul.f32 %v281, %v419
    %v428 = vmul.f32 %v282, %v420
    %v429 = vmul.f32 %v283, %v421
    %v430 = vmul.f32 %v284, %v422
    %s431 = scalar_lea.vmem %s2, 128
    %v432 = vld [vmem:[%s431] sm:$0xff]
    %v433 = vld [vmem:[%s431 + $0x8] sm:$0xff]
    %v434 = vld [vmem:[%s431 + $0x10] sm:$0xf]
    %v435 = vld [vmem:[%s431 + $0x18] sm:$0xf]
    %v436 = vmul.f32 %v236, %v432
    %v437 = vmul.f32 %v237, %v433
    %v438 = vmul.f32 %v238, %v434
    %v439 = vmul.f32 %v239, %v435
    %v440 = vmul.f32 %v240, %v432
    %v441 = vmul.f32 %v241, %v433
    %v442 = vmul.f32 %v242, %v434
    %v443 = vmul.f32 %v243, %v435
    %v444 = vadd.f32 %v423, %v436
    %v445 = vadd.f32 %v424, %v437
    %v446 = vadd.f32 %v425, %v438
    %v447 = vadd.f32 %v426, %v439
    %v448 = vadd.f32 %v427, %v440
    %v449 = vadd.f32 %v428, %v441
    %v450 = vadd.f32 %v429, %v442
    %v451 = vadd.f32 %v430, %v443
    %s452 = scalar_lea.vmem %s2, 160
    %v453 = vld [vmem:[%s452] sm:$0xff]
    %v454 = vld [vmem:[%s452 + $0x8] sm:$0xff]
    %v455 = vld [vmem:[%s452 + $0x10] sm:$0xf]
    %v456 = vld [vmem:[%s452 + $0x18] sm:$0xf]
    %v457 = vmul.f32 %v317, %v453
    %v458 = vmul.f32 %v318, %v454
    %v459 = vmul.f32 %v319, %v455
    %v460 = vmul.f32 %v320, %v456
    %v461 = vmul.f32 %v321, %v453
    %v462 = vmul.f32 %v322, %v454
    %v463 = vmul.f32 %v323, %v455
    %v464 = vmul.f32 %v324, %v456
    %v465 = vadd.f32 %v444, %v457
    %v466 = vadd.f32 %v445, %v458
    %v467 = vadd.f32 %v446, %v459
    %v468 = vadd.f32 %v447, %v460
    %v469 = vadd.f32 %v448, %v461
    %v470 = vadd.f32 %v449, %v462
    %v471 = vadd.f32 %v450, %v463
    %v472 = vadd.f32 %v451, %v464
    %v473 = vadd.f32 %v410, %v465
    %v474 = vadd.f32 %v411, %v466
    %v475 = vadd.f32 %v412, %v467
    %v476 = vadd.f32 %v413, %v468
    %v477 = vadd.f32 %v414, %v469
    %v478 = vadd.f32 %v415, %v470
    %v479 = vadd.f32 %v416, %v471
    %v480 = vadd.f32 %v417, %v472
    %s481 = scalar_lea.vmem %s2, 192
    %v482 = vld [vmem:[%s481] sm:$0xff]
    %v483 = vld [vmem:[%s481 + $0x8] sm:$0xff]
    %v484 = vld [vmem:[%s481 + $0x10] sm:$0xf]
    %v485 = vld [vmem:[%s481 + $0x18] sm:$0xf]
    %v486 = vmul.f32 %v277, %v482
    %v487 = vmul.f32 %v278, %v483
    %v488 = vmul.f32 %v279, %v484
    %v489 = vmul.f32 %v280, %v485
    %v490 = vmul.f32 %v281, %v482
    %v491 = vmul.f32 %v282, %v483
    %v492 = vmul.f32 %v283, %v484
    %v493 = vmul.f32 %v284, %v485
    %s494 = scalar_lea.vmem %s2, 224
    %v495 = vld [vmem:[%s494] sm:$0xff]
    %v496 = vld [vmem:[%s494 + $0x8] sm:$0xff]
    %v497 = vld [vmem:[%s494 + $0x10] sm:$0xf]
    %v498 = vld [vmem:[%s494 + $0x18] sm:$0xf]
    %v499 = vmul.f32 %v236, %v495
    %v500 = vmul.f32 %v237, %v496
    %v501 = vmul.f32 %v238, %v497
    %v502 = vmul.f32 %v239, %v498
    %v503 = vmul.f32 %v240, %v495
    %v504 = vmul.f32 %v241, %v496
    %v505 = vmul.f32 %v242, %v497
    %v506 = vmul.f32 %v243, %v498
    %v507 = vadd.f32 %v486, %v499
    %v508 = vadd.f32 %v487, %v500
    %v509 = vadd.f32 %v488, %v501
    %v510 = vadd.f32 %v489, %v502
    %v511 = vadd.f32 %v490, %v503
    %v512 = vadd.f32 %v491, %v504
    %v513 = vadd.f32 %v492, %v505
    %v514 = vadd.f32 %v493, %v506
    %s515 = scalar_lea.vmem %s2, 256
    %v516 = vld [vmem:[%s515] sm:$0xff]
    %v517 = vld [vmem:[%s515 + $0x8] sm:$0xff]
    %v518 = vld [vmem:[%s515 + $0x10] sm:$0xf]
    %v519 = vld [vmem:[%s515 + $0x18] sm:$0xf]
    %v520 = vmul.f32 %v317, %v516
    %v521 = vmul.f32 %v318, %v517
    %v522 = vmul.f32 %v319, %v518
    %v523 = vmul.f32 %v320, %v519
    %v524 = vmul.f32 %v321, %v516
    %v525 = vmul.f32 %v322, %v517
    %v526 = vmul.f32 %v323, %v518
    %v527 = vmul.f32 %v324, %v519
    %v528 = vadd.f32 %v507, %v520
    %v529 = vadd.f32 %v508, %v521
    %v530 = vadd.f32 %v509, %v522
    %v531 = vadd.f32 %v510, %v523
    %v532 = vadd.f32 %v511, %v524
    %v533 = vadd.f32 %v512, %v525
    %v534 = vadd.f32 %v513, %v526
    %v535 = vadd.f32 %v514, %v527
    %536 = vrot.lane.b32.xlu0 %v528, 112
    %v537 = vpop.permute.xlu0 %536
    %538 = vrot.lane.b32.xlu0 %v530, 112
    %v539 = vpop.permute.xlu0 %538
    %540 = vrot.lane.b32.xlu0 %v532, 112
    %v541 = vpop.permute.xlu0 %540
    %542 = vrot.lane.b32.xlu0 %v534, 112
    %v543 = vpop.permute.xlu0 %542
    %544 = vrot.lane.b32.xlu0 %v529, 112
    %v545 = vpop.permute.xlu0 %544
    %546 = vrot.lane.b32.xlu0 %v531, 112
    %v547 = vpop.permute.xlu0 %546
    %548 = vrot.lane.b32.xlu0 %v533, 112
    %v549 = vpop.permute.xlu0 %548
    %550 = vrot.lane.b32.xlu0 %v535, 112
    %v551 = vpop.permute.xlu0 %550
    %vm552 = vcmp.lt.s32.totalorder %v261, 112
    %v553 = vsel %vm552, %v537, %v545
    %v554 = vsel %vm552, %v539, %v547
    %v555 = vsel %vm552, %v541, %v549
    %v556 = vsel %vm552, %v543, %v551
    %v557 = vsel %vm552, %v545, %v537
    %v558 = vsel %vm552, %v547, %v539
    %v559 = vsel %vm552, %v549, %v541
    %v560 = vsel %vm552, %v551, %v543
    %s561 = scalar_lea.vmem %s5, 4
    %v562 = vld [vmem:[%s561] sm:$0x3]
    %v564 = vperm.slane %v562, 0
    %v565 = vperm.slane %v562, 1
    %v568 = vmul.f32 %v553, %v564
    %v569 = vmul.f32 %v557, %v565
    %v570 = vmul.f32 %v554, %v564
    %v571 = vmul.f32 %v558, %v565
    %v572 = vmul.f32 %v555, %v564
    %v573 = vmul.f32 %v559, %v565
    %v574 = vmul.f32 %v556, %v564
    %v575 = vmul.f32 %v560, %v565
    %v576 = vadd.f32 %v473, %v568
    %v577 = vadd.f32 %v474, %v569
    %v578 = vadd.f32 %v475, %v570
    %v579 = vadd.f32 %v476, %v571
    %v580 = vadd.f32 %v477, %v572
    %v581 = vadd.f32 %v478, %v573
    %v582 = vadd.f32 %v479, %v574
    %v583 = vadd.f32 %v480, %v575
    %v584 = vadd.f32 %v576, %v577
    %v585 = vadd.f32 %v584, %v580
    %v586 = vadd.f32 %v585, %v581
    %587 = vadd.xlane.f32.xlu0 %v586
    %v588 = vpop.xlane.xlu0 %587
    %v589 = vsel %vm156, %v578, 0.0
    %v590 = vsel %vm156, %v579, 0.0
    %v591 = vadd.f32 %v589, %v590
    %v592 = vsel %vm156, %v582, 0.0
    %v593 = vadd.f32 %v591, %v592
    %v594 = vsel %vm156, %v583, 0.0
    %v595 = vadd.f32 %v593, %v594
    %596 = vadd.xlane.f32.xlu0 %v595
    %v597 = vpop.xlane.xlu0 %596
    %v598 = vmul.f32 %v576, %v576
    %v599 = vmul.f32 %v577, %v577
    %v600 = vmul.f32 %v578, %v578
    %v601 = vmul.f32 %v579, %v579
    %v602 = vmul.f32 %v580, %v580
    %v603 = vmul.f32 %v581, %v581
    %v604 = vmul.f32 %v582, %v582
    %v605 = vmul.f32 %v583, %v583
    %v606 = vadd.f32 %v598, %v599
    %v607 = vadd.f32 %v606, %v602
    %v608 = vadd.f32 %v607, %v603
    %609 = vadd.xlane.f32.xlu0 %v608
    %v610 = vpop.xlane.xlu0 %609
    %v611 = vsel %vm156, %v600, 0.0
    %v612 = vsel %vm156, %v601, 0.0
    %v613 = vadd.f32 %v611, %v612
    %v614 = vsel %vm156, %v604, 0.0
    %v615 = vadd.f32 %v613, %v614
    %v616 = vsel %vm156, %v605, 0.0
    %v617 = vadd.f32 %v615, %v616
    %618 = vadd.xlane.f32.xlu0 %v617
    %v619 = vpop.xlane.xlu0 %618
    %v620 = vmul.f32 %v588, 0.001953125
    %v621 = vmul.f32 %v597, 0.001953125
    %v622 = vmul.f32 %v610, 0.001953125
    %v623 = vmul.f32 %v619, 0.001953125
    %v624 = vmul.f32 %v620, %v620
    %v625 = vmul.f32 %v621, %v621
    %v626 = vsub.f32 %v622, %v624
    %v627 = vsub.f32 %v623, %v625
    %v628 = vmax.f32 %v626, 0.0
    %v629 = vmax.f32 %v627, 0.0
    %v630 = vsub.f32 %v576, %v620
    %v631 = vsub.f32 %v577, %v620
    %v632 = vsub.f32 %v578, %v621
    %v633 = vsub.f32 %v579, %v621
    %v634 = vsub.f32 %v580, %v620
    %v635 = vsub.f32 %v581, %v620
    %v636 = vsub.f32 %v582, %v621
    %v637 = vsub.f32 %v583, %v621
    %v638 = vadd.f32 %v628, 1e-05
    %v639 = vadd.f32 %v629, 1e-05
    %v640 = vrsqrt.pop %v638
    %v641 = vmul.f32 %v640, %v638
    %v642 = vmul.f32 %v641, %v640
    %v643 = vmul.f32 0.5, %v642
    %v644 = vsub.f32 1.5, %v643
    %v645 = vmul.f32 %v640, %v644
    %vm646 = vweird.f32 %v638
    %vm647 = vweird.f32 %v640
    %vm648 = vmor %vm646, %vm647
    %v649 = vsel %vm648, %v640, %v645
    %v650 = vrsqrt.pop %v639
    %v651 = vmul.f32 %v650, %v639
    %v652 = vmul.f32 %v651, %v650
    %v653 = vmul.f32 0.5, %v652
    %v654 = vsub.f32 1.5, %v653
    %v655 = vmul.f32 %v650, %v654
    %vm656 = vweird.f32 %v639
    %vm657 = vweird.f32 %v650
    %vm658 = vmor %vm656, %vm657
    %v659 = vsel %vm658, %v650, %v655
    %v660 = vmul.f32 %v630, %v649
    %v661 = vmul.f32 %v631, %v649
    %v662 = vmul.f32 %v632, %v659
    %v663 = vmul.f32 %v633, %v659
    %v664 = vmul.f32 %v634, %v649
    %v665 = vmul.f32 %v635, %v649
    %v666 = vmul.f32 %v636, %v659
    %v667 = vmul.f32 %v637, %v659
    %v668 = vmax.f32 %v660, 0.0
    %v669 = vmax.f32 %v661, 0.0
    %v670 = vmax.f32 %v662, 0.0
    %v671 = vmax.f32 %v663, 0.0
    %v672 = vmax.f32 %v664, 0.0
    %v673 = vmax.f32 %v665, 0.0
    %v674 = vmax.f32 %v666, 0.0
    %v675 = vmax.f32 %v667, 0.0
    %v676 = vld [vmem:[%s3] sm:$0xff]
    %v677 = vperm.slane %v668, 0
    %v678 = vperm.slane %v669, 0
    %v679 = vperm.slane %v672, 0
    %v680 = vperm.slane %v673, 0
    %682 = vst [vmem:[#allocation1] ss:$2 sm:$0xff] %v676
    %v683 = vld.sshfl [vmem:[#allocation1] sm:$0xff pattern:$0x75316420]
    %v684 = vld.sshfl [vmem:[#allocation1 + $0x8] sm:$0xff pattern:$0x75316420]
    %s685 = scalar_lea.vmem [#allocation1], 16
    %686 = vst [vmem:[%s685] ss:$2 sm:$0xff] %v676
    %v687 = vld.sshfl [vmem:[#allocation1 + $0x10] sm:$0xff pattern:$0x75316420]
    %v688 = vld.sshfl [vmem:[#allocation1 + $0x18] sm:$0xff pattern:$0x75316420]
    %v693 = vmul.f32 %v677, %v683
    %v694 = vmul.f32 %v678, %v684
    %v695 = vmul.f32 %v679, %v687
    %v696 = vmul.f32 %v680, %v688
    %s697 = scalar_lea.vmem %s3, 8
    %v698 = vld [vmem:[%s697] sm:$0xff]
    %v699 = vperm.slane %v668, 1
    %v700 = vperm.slane %v669, 1
    %v701 = vperm.slane %v672, 1
    %v702 = vperm.slane %v673, 1
    %704 = vst [vmem:[#allocation1] ss:$2 sm:$0xff] %v698
    %v705 = vld.sshfl [vmem:[#allocation1] sm:$0xff pattern:$0x75316420]
    %v706 = vld.sshfl [vmem:[#allocation1 + $0x8] sm:$0xff pattern:$0x75316420]
    %s707 = scalar_lea.vmem [#allocation1], 16
    %708 = vst [vmem:[%s707] ss:$2 sm:$0xff] %v698
    %v709 = vld.sshfl [vmem:[#allocation1 + $0x10] sm:$0xff pattern:$0x75316420]
    %v710 = vld.sshfl [vmem:[#allocation1 + $0x18] sm:$0xff pattern:$0x75316420]
    %v715 = vmul.f32 %v699, %v705
    %v716 = vmul.f32 %v700, %v706
    %v717 = vmul.f32 %v701, %v709
    %v718 = vmul.f32 %v702, %v710
    %v719 = vadd.f32 %v693, %v715
    %v720 = vadd.f32 %v694, %v716
    %v721 = vadd.f32 %v695, %v717
    %v722 = vadd.f32 %v696, %v718
    %s723 = scalar_lea.vmem %s3, 16
    %v724 = vld [vmem:[%s723] sm:$0xff]
    %v725 = vperm.slane %v668, 2
    %v726 = vperm.slane %v669, 2
    %v727 = vperm.slane %v672, 2
    %v728 = vperm.slane %v673, 2
    %730 = vst [vmem:[#allocation1] ss:$2 sm:$0xff] %v724
    %v731 = vld.sshfl [vmem:[#allocation1] sm:$0xff pattern:$0x75316420]
    %v732 = vld.sshfl [vmem:[#allocation1 + $0x8] sm:$0xff pattern:$0x75316420]
    %s733 = scalar_lea.vmem [#allocation1], 16
    %734 = vst [vmem:[%s733] ss:$2 sm:$0xff] %v724
    %v735 = vld.sshfl [vmem:[#allocation1 + $0x10] sm:$0xff pattern:$0x75316420]
    %v736 = vld.sshfl [vmem:[#allocation1 + $0x18] sm:$0xff pattern:$0x75316420]
    %v741 = vmul.f32 %v725, %v731
    %v742 = vmul.f32 %v726, %v732
    %v743 = vmul.f32 %v727, %v735
    %v744 = vmul.f32 %v728, %v736
    %v745 = vadd.f32 %v719, %v741
    %v746 = vadd.f32 %v720, %v742
    %v747 = vadd.f32 %v721, %v743
    %v748 = vadd.f32 %v722, %v744
    %s749 = scalar_lea.vmem %s3, 24
    %v750 = vld [vmem:[%s749] sm:$0xff]
    %v751 = vperm.slane %v668, 3
    %v752 = vperm.slane %v669, 3
    %v753 = vperm.slane %v672, 3
    %v754 = vperm.slane %v673, 3
    %756 = vst [vmem:[#allocation1] ss:$2 sm:$0xff] %v750
    %v757 = vld.sshfl [vmem:[#allocation1] sm:$0xff pattern:$0x75316420]
    %v758 = vld.sshfl [vmem:[#allocation1 + $0x8] sm:$0xff pattern:$0x75316420]
    %s759 = scalar_lea.vmem [#allocation1], 16
    %760 = vst [vmem:[%s759] ss:$2 sm:$0xff] %v750
    %v761 = vld.sshfl [vmem:[#allocation1 + $0x10] sm:$0xff pattern:$0x75316420]
    %v762 = vld.sshfl [vmem:[#allocation1 + $0x18] sm:$0xff pattern:$0x75316420]
    %v767 = vmul.f32 %v751, %v757
    %v768 = vmul.f32 %v752, %v758
    %v769 = vmul.f32 %v753, %v761
    %v770 = vmul.f32 %v754, %v762
    %v771 = vadd.f32 %v745, %v767
    %v772 = vadd.f32 %v746, %v768
    %v773 = vadd.f32 %v747, %v769
    %v774 = vadd.f32 %v748, %v770
    %s775 = scalar_lea.vmem %s3, 32
    %v776 = vld [vmem:[%s775] sm:$0xff]
    %v777 = vperm.slane %v668, 4
    %v778 = vperm.slane %v669, 4
    %v779 = vperm.slane %v672, 4
    %v780 = vperm.slane %v673, 4
    %782 = vst [vmem:[#allocation1] ss:$2 sm:$0xff] %v776
    %v783 = vld.sshfl [vmem:[#allocation1] sm:$0xff pattern:$0x75316420]
    %v784 = vld.sshfl [vmem:[#allocation1 + $0x8] sm:$0xff pattern:$0x75316420]
    %s785 = scalar_lea.vmem [#allocation1], 16
    %786 = vst [vmem:[%s785] ss:$2 sm:$0xff] %v776
    %v787 = vld.sshfl [vmem:[#allocation1 + $0x10] sm:$0xff pattern:$0x75316420]
    %v788 = vld.sshfl [vmem:[#allocation1 + $0x18] sm:$0xff pattern:$0x75316420]
    %v793 = vmul.f32 %v777, %v783
    %v794 = vmul.f32 %v778, %v784
    %v795 = vmul.f32 %v779, %v787
    %v796 = vmul.f32 %v780, %v788
    %v797 = vadd.f32 %v771, %v793
    %v798 = vadd.f32 %v772, %v794
    %v799 = vadd.f32 %v773, %v795
    %v800 = vadd.f32 %v774, %v796
    %s801 = scalar_lea.vmem %s3, 40
    %v802 = vld [vmem:[%s801] sm:$0xff]
    %v803 = vperm.slane %v668, 5
    %v804 = vperm.slane %v669, 5
    %v805 = vperm.slane %v672, 5
    %v806 = vperm.slane %v673, 5
    %808 = vst [vmem:[#allocation1] ss:$2 sm:$0xff] %v802
    %v809 = vld.sshfl [vmem:[#allocation1] sm:$0xff pattern:$0x75316420]
    %v810 = vld.sshfl [vmem:[#allocation1 + $0x8] sm:$0xff pattern:$0x75316420]
    %s811 = scalar_lea.vmem [#allocation1], 16
    %812 = vst [vmem:[%s811] ss:$2 sm:$0xff] %v802
    %v813 = vld.sshfl [vmem:[#allocation1 + $0x10] sm:$0xff pattern:$0x75316420]
    %v814 = vld.sshfl [vmem:[#allocation1 + $0x18] sm:$0xff pattern:$0x75316420]
    %v819 = vmul.f32 %v803, %v809
    %v820 = vmul.f32 %v804, %v810
    %v821 = vmul.f32 %v805, %v813
    %v822 = vmul.f32 %v806, %v814
    %v823 = vadd.f32 %v797, %v819
    %v824 = vadd.f32 %v798, %v820
    %v825 = vadd.f32 %v799, %v821
    %v826 = vadd.f32 %v800, %v822
    %s827 = scalar_lea.vmem %s3, 48
    %v828 = vld [vmem:[%s827] sm:$0xff]
    %v829 = vperm.slane %v668, 6
    %v830 = vperm.slane %v669, 6
    %v831 = vperm.slane %v672, 6
    %v832 = vperm.slane %v673, 6
    %834 = vst [vmem:[#allocation1] ss:$2 sm:$0xff] %v828
    %v835 = vld.sshfl [vmem:[#allocation1] sm:$0xff pattern:$0x75316420]
    %v836 = vld.sshfl [vmem:[#allocation1 + $0x8] sm:$0xff pattern:$0x75316420]
    %s837 = scalar_lea.vmem [#allocation1], 16
    %838 = vst [vmem:[%s837] ss:$2 sm:$0xff] %v828
    %v839 = vld.sshfl [vmem:[#allocation1 + $0x10] sm:$0xff pattern:$0x75316420]
    %v840 = vld.sshfl [vmem:[#allocation1 + $0x18] sm:$0xff pattern:$0x75316420]
    %v845 = vmul.f32 %v829, %v835
    %v846 = vmul.f32 %v830, %v836
    %v847 = vmul.f32 %v831, %v839
    %v848 = vmul.f32 %v832, %v840
    %v849 = vadd.f32 %v823, %v845
    %v850 = vadd.f32 %v824, %v846
    %v851 = vadd.f32 %v825, %v847
    %v852 = vadd.f32 %v826, %v848
    %s853 = scalar_lea.vmem %s3, 56
    %v854 = vld [vmem:[%s853] sm:$0xff]
    %v855 = vperm.slane %v668, 7
    %v856 = vperm.slane %v669, 7
    %v857 = vperm.slane %v672, 7
    %v858 = vperm.slane %v673, 7
    %860 = vst [vmem:[#allocation1] ss:$2 sm:$0xff] %v854
    %v861 = vld.sshfl [vmem:[#allocation1] sm:$0xff pattern:$0x75316420]
    %v862 = vld.sshfl [vmem:[#allocation1 + $0x8] sm:$0xff pattern:$0x75316420]
    %s863 = scalar_lea.vmem [#allocation1], 16
    %864 = vst [vmem:[%s863] ss:$2 sm:$0xff] %v854
    %v865 = vld.sshfl [vmem:[#allocation1 + $0x10] sm:$0xff pattern:$0x75316420]
    %v866 = vld.sshfl [vmem:[#allocation1 + $0x18] sm:$0xff pattern:$0x75316420]
    %v871 = vmul.f32 %v855, %v861
    %v872 = vmul.f32 %v856, %v862
    %v873 = vmul.f32 %v857, %v865
    %v874 = vmul.f32 %v858, %v866
    %v875 = vadd.f32 %v849, %v871
    %v876 = vadd.f32 %v850, %v872
    %v877 = vadd.f32 %v851, %v873
    %v878 = vadd.f32 %v852, %v874
    %s879 = scalar_lea.vmem %s3, 64
    %v880 = vld [vmem:[%s879] sm:$0xff]
    %v881 = vperm.slane %v670, 0
    %v882 = vperm.slane %v671, 0
    %v883 = vperm.slane %v674, 0
    %v884 = vperm.slane %v675, 0
    %886 = vst [vmem:[#allocation1] ss:$2 sm:$0xff] %v880
    %v887 = vld.sshfl [vmem:[#allocation1] sm:$0xff pattern:$0x75316420]
    %v888 = vld.sshfl [vmem:[#allocation1 + $0x8] sm:$0xff pattern:$0x75316420]
    %s889 = scalar_lea.vmem [#allocation1], 16
    %890 = vst [vmem:[%s889] ss:$2 sm:$0xff] %v880
    %v891 = vld.sshfl [vmem:[#allocation1 + $0x10] sm:$0xff pattern:$0x75316420]
    %v892 = vld.sshfl [vmem:[#allocation1 + $0x18] sm:$0xff pattern:$0x75316420]
    %v897 = vmul.f32 %v881, %v887
    %v898 = vmul.f32 %v882, %v888
    %v899 = vmul.f32 %v883, %v891
    %v900 = vmul.f32 %v884, %v892
    %v901 = vadd.f32 %v875, %v897
    %v902 = vadd.f32 %v876, %v898
    %v903 = vadd.f32 %v877, %v899
    %v904 = vadd.f32 %v878, %v900
    %s905 = scalar_lea.vmem %s3, 72
    %v906 = vld [vmem:[%s905] sm:$0xff]
    %v907 = vperm.slane %v670, 1
    %v908 = vperm.slane %v671, 1
    %v909 = vperm.slane %v674, 1
    %v910 = vperm.slane %v675, 1
    %912 = vst [vmem:[#allocation1] ss:$2 sm:$0xff] %v906
    %v913 = vld.sshfl [vmem:[#allocation1] sm:$0xff pattern:$0x75316420]
    %v914 = vld.sshfl [vmem:[#allocation1 + $0x8] sm:$0xff pattern:$0x75316420]
    %s915 = scalar_lea.vmem [#allocation1], 16
    %916 = vst [vmem:[%s915] ss:$2 sm:$0xff] %v906
    %v917 = vld.sshfl [vmem:[#allocation1 + $0x10] sm:$0xff pattern:$0x75316420]
    %v918 = vld.sshfl [vmem:[#allocation1 + $0x18] sm:$0xff pattern:$0x75316420]
    %v923 = vmul.f32 %v907, %v913
    %v924 = vmul.f32 %v908, %v914
    %v925 = vmul.f32 %v909, %v917
    %v926 = vmul.f32 %v910, %v918
    %v927 = vadd.f32 %v901, %v923
    %v928 = vadd.f32 %v902, %v924
    %v929 = vadd.f32 %v903, %v925
    %v930 = vadd.f32 %v904, %v926
    %s931 = scalar_lea.vmem %s3, 80
    %v932 = vld [vmem:[%s931] sm:$0xff]
    %v933 = vperm.slane %v670, 2
    %v934 = vperm.slane %v671, 2
    %v935 = vperm.slane %v674, 2
    %v936 = vperm.slane %v675, 2
    %938 = vst [vmem:[#allocation1] ss:$2 sm:$0xff] %v932
    %v939 = vld.sshfl [vmem:[#allocation1] sm:$0xff pattern:$0x75316420]
    %v940 = vld.sshfl [vmem:[#allocation1 + $0x8] sm:$0xff pattern:$0x75316420]
    %s941 = scalar_lea.vmem [#allocation1], 16
    %942 = vst [vmem:[%s941] ss:$2 sm:$0xff] %v932
    %v943 = vld.sshfl [vmem:[#allocation1 + $0x10] sm:$0xff pattern:$0x75316420]
    %v944 = vld.sshfl [vmem:[#allocation1 + $0x18] sm:$0xff pattern:$0x75316420]
    %v949 = vmul.f32 %v933, %v939
    %v950 = vmul.f32 %v934, %v940
    %v951 = vmul.f32 %v935, %v943
    %v952 = vmul.f32 %v936, %v944
    %v953 = vadd.f32 %v927, %v949
    %v954 = vadd.f32 %v928, %v950
    %v955 = vadd.f32 %v929, %v951
    %v956 = vadd.f32 %v930, %v952
    %s957 = scalar_lea.vmem %s3, 88
    %v958 = vld [vmem:[%s957] sm:$0xff]
    %v959 = vperm.slane %v670, 3
    %v960 = vperm.slane %v671, 3
    %v961 = vperm.slane %v674, 3
    %v962 = vperm.slane %v675, 3
    %964 = vst [vmem:[#allocation1] ss:$2 sm:$0xff] %v958
    %v965 = vld.sshfl [vmem:[#allocation1] sm:$0xff pattern:$0x75316420]
    %v966 = vld.sshfl [vmem:[#allocation1 + $0x8] sm:$0xff pattern:$0x75316420]
    %s967 = scalar_lea.vmem [#allocation1], 16
    %968 = vst [vmem:[%s967] ss:$2 sm:$0xff] %v958
    %v969 = vld.sshfl [vmem:[#allocation1 + $0x10] sm:$0xff pattern:$0x75316420]
    %v970 = vld.sshfl [vmem:[#allocation1 + $0x18] sm:$0xff pattern:$0x75316420]
    %v975 = vmul.f32 %v959, %v965
    %v976 = vmul.f32 %v960, %v966
    %v977 = vmul.f32 %v961, %v969
    %v978 = vmul.f32 %v962, %v970
    %v979 = vadd.f32 %v953, %v975
    %v980 = vadd.f32 %v954, %v976
    %v981 = vadd.f32 %v955, %v977
    %v982 = vadd.f32 %v956, %v978
    %v983 = vsel %vm156, %v979, 0.0
    %v984 = vsel %vm156, %v980, 0.0
    %v985 = vadd.f32 %v983, %v984
    %v986 = vsel %vm156, %v981, 0.0
    %v987 = vadd.f32 %v985, %v986
    %v988 = vsel %vm156, %v982, 0.0
    %v989 = vadd.f32 %v987, %v988
    %990 = vadd.xlane.f32.xlu0 %v989
    %v991 = vpop.xlane.xlu0 %990
    %v992 = vmul.f32 %v979, %v979
    %v993 = vmul.f32 %v980, %v980
    %v994 = vmul.f32 %v981, %v981
    %v995 = vmul.f32 %v982, %v982
    %v996 = vsel %vm156, %v992, 0.0
    %v997 = vsel %vm156, %v993, 0.0
    %v998 = vadd.f32 %v996, %v997
    %v999 = vsel %vm156, %v994, 0.0
    %v1000 = vadd.f32 %v998, %v999
    %v1001 = vsel %vm156, %v995, 0.0
    %v1002 = vadd.f32 %v1000, %v1001
    %1003 = vadd.xlane.f32.xlu0 %v1002
    %v1004 = vpop.xlane.xlu0 %1003
    %v1005 = vmul.f32 %v991, 0.001953125
    %v1006 = vmul.f32 %v1004, 0.001953125
    %v1007 = vmul.f32 %v1005, %v1005
    %v1008 = vsub.f32 %v1006, %v1007
    %v1009 = vmax.f32 %v1008, 0.0
    %v1010 = vsub.f32 %v979, %v1005
    %v1011 = vsub.f32 %v980, %v1005
    %v1012 = vsub.f32 %v981, %v1005
    %v1013 = vsub.f32 %v982, %v1005
    %v1014 = vadd.f32 %v1009, 1e-05
    %v1015 = vrsqrt.pop %v1014
    %v1016 = vmul.f32 %v1015, %v1014
    %v1017 = vmul.f32 %v1016, %v1015
    %v1018 = vmul.f32 0.5, %v1017
    %v1019 = vsub.f32 1.5, %v1018
    %v1020 = vmul.f32 %v1015, %v1019
    %vm1021 = vweird.f32 %v1014
    %vm1022 = vweird.f32 %v1015
    %vm1023 = vmor %vm1021, %vm1022
    %v1024 = vsel %vm1023, %v1015, %v1020
    %v1025 = vmul.f32 %v1010, %v1024
    %v1026 = vmul.f32 %v1011, %v1024
    %v1027 = vmul.f32 %v1012, %v1024
    %v1028 = vmul.f32 %v1013, %v1024
    %1029 = vst [vmem:[#allocation1] ss:$2 sm:$0xff] %v24
    %v1030 = vld.sshfl [vmem:[#allocation1] sm:$0xff pattern:$0x75316420]
    %v1031 = vld.sshfl [vmem:[#allocation1 + $0x8] sm:$0xff pattern:$0x75316420]
    %s1032 = scalar_lea.vmem [#allocation1], 16
    %1033 = vst [vmem:[%s1032] ss:$2 sm:$0xff] %v25
    %v1034 = vld.sshfl [vmem:[#allocation1 + $0x10] sm:$0xff pattern:$0x75316420]
    %v1035 = vld.sshfl [vmem:[#allocation1 + $0x18] sm:$0xff pattern:$0x75316420]
    %v1040 = vadd.f32 %v1025, %v1030
    %v1041 = vadd.f32 %v1026, %v1031
    %v1042 = vadd.f32 %v1027, %v1034
    %v1043 = vadd.f32 %v1028, %v1035
    %v1048 = vrot.slane %v1041, 4
    %v1049 = vrot.slane %v1043, 4
    %v1050 = vsel %vm156, %v1040, %v1048
    %v1051 = vsel %vm156, %v1042, %v1049
    %1054 = vst [vmem:[#allocation2] sm:$0xff] %v1050
    %1055 = vst [vmem:[#allocation2 + $0x8] sm:$0xff] %v1051
    // Predicated region
    $region26: #{tpu_custom_call.1} parent=1 // pred_check
      _
    $region27: #{tpu_custom_call.1} parent=1 // pred_check_branch
      %1057 = sbr.rel (0) target = $region29
    $region28: #{tpu_custom_call.1} parent=1 // pred_region
      %1059 = vsyncadd [#allocation3], 0
      %s1060 = sshll.u32 [#allocation2], 4
      %s1061 = int_to_ptr.vmem [resolvable:$true] %s1060
      %s1062 = sshll.u32 %s6, 4
      %s1063 = int_to_ptr.hbm [resolvable:$true] %s1062
      %1068 = dma.vmem_to_hbm [thread:$0]  %s1061, 256, %s1063, [#allocation3], 128, 128, 8
    $region29: #{tpu_custom_call.1} parent=1 // pred_fallthru
      _
    // Predicated region
    $region30: #{tpu_custom_call.1} parent=1 // pred_check
      _
    $region31: #{tpu_custom_call.1} parent=1 // pred_check_branch
      %1070 = sbr.rel (0) target = $region33
    $region32: #{tpu_custom_call.1} parent=1 // pred_region
      %1072 = dma.done [#allocation3], 256
    $region33: #{tpu_custom_call.1} parent=1 // pred_fallthru
      _
    %1073 = vsyncpa [#allocation3], 1

</llo_original>
